<compile_context>
chip_gen: v5e
topology: v5e:2x2
jax: 0.10.0
libtpu: 0.0.40
codegen_flags: <defaults>
</compile_context>

<pallas_src>
import functools

import jax
import jax.numpy as jnp
from jax.experimental import pallas as pl
from jax.experimental.pallas import tpu as pltpu

BN_EPS = 1e-5
LANE = 128        # pad Cout to 128 -> lane-dense, unmasked output stores
KPACK = 16        # pad K only to the bf16 sublane pack, not to 128
MAX_TM = 2048     # M-tile cap (~1.5 MiB bf16 patch tile at K=288 per buffer)


def _round_up(x, m):
    return -(-x // m) * m


# ---------------------------------------------------------------------------
# Pallas kernel: tiled matmul + bias (+ ReLU) (+ fused BN batch statistics)
# ---------------------------------------------------------------------------
def _conv_kernel(p_ref, w_ref, b_ref, o_ref, *stats_refs,
                 apply_relu, compute_stats, m_valid, tm, nt):
    # p_ref: [TM, Kp] bf16 (tiled over M), w_ref: [Kp, Cp] bf16 (resident),
    # b_ref: [1, Cp] f32 (resident), o_ref: [TM, Cp] bf16/f32.
    acc = jnp.dot(p_ref[...], w_ref[...], preferred_element_type=jnp.float32)
    acc = acc + b_ref[...]
    if apply_relu:
        acc = jnp.maximum(acc, 0.0)
    # f32 accumulation; bf16 store (f32 only for the final layer) -> halves the
    # output HBM write while keeping the store lane-dense (Cp = 128).
    o_ref[...] = acc.astype(o_ref.dtype)

    if compute_stats:
        sum_ref, sq_ref = stats_refs
        cp = acc.shape[1]

        def write(y):
            sum_ref[...] = jnp.sum(y, axis=0).reshape(1, 1, cp)
            sq_ref[...] = jnp.sum(y * y, axis=0).reshape(1, 1, cp)

        if nt * tm > m_valid:
            # Only the tail tile contains zero-padded M rows; only it pays the
            # iota/where masking cost.
            is_tail = pl.program_id(0) == nt - 1

            @pl.when(jnp.logical_not(is_tail))
            def _():
                write(acc)

            @pl.when(is_tail)
            def _():
                row = (nt - 1) * tm + jax.lax.broadcasted_iota(
                    jnp.int32, (tm, 1), 0)
                write(jnp.where(row < m_valid, acc, 0.0))
        else:
            write(acc)


def conv_matmul_pallas(patches, w2d, bias, *, apply_relu, compute_stats,
                       m_valid, k_valid, c_valid, tm, out_dtype):
    """patches: [Mp, Kp] bf16, w2d: [Kp, Cp] bf16, bias: [1, Cp] f32."""
    Mp, Kp = patches.shape
    Cp = w2d.shape[1]
    nt = Mp // tm                       # Mp is a multiple of tm by construction

    kernel = functools.partial(_conv_kernel, apply_relu=apply_relu,
                               compute_stats=compute_stats,
                               m_valid=m_valid, tm=tm, nt=nt)

    y_shape = jax.ShapeDtypeStruct((Mp, Cp), out_dtype)
    y_spec = pl.BlockSpec((tm, Cp), lambda i: (i, 0))
    in_specs = [
        pl.BlockSpec((tm, Kp), lambda i: (i, 0)),   # patch tile (pipelined)
        pl.BlockSpec((Kp, Cp), lambda i: (0, 0)),   # weights (resident)
        pl.BlockSpec((1, Cp), lambda i: (0, 0)),    # bias (resident)
    ]
    if compute_stats:
        st_shape = jax.ShapeDtypeStruct((nt, 1, Cp), jnp.float32)
        st_spec = pl.BlockSpec((1, 1, Cp), lambda i: (i, 0, 0))
        out_shape = (y_shape, st_shape, st_shape)
        out_specs = (y_spec, st_spec, st_spec)
    else:
        out_shape = y_shape
        out_specs = y_spec

    out_bytes = jnp.dtype(out_dtype).itemsize
    # Double-buffered patch + output tiles, resident weights/bias, plus margin.
    vmem_bytes = (2 * (tm * Kp * 2 + tm * Cp * out_bytes + 2 * Cp * 4)
                  + 2 * (Kp * Cp * 2 + Cp * 4)) + (2 << 20)
    vmem_bytes = int(min(vmem_bytes, 48 << 20))   # <= 48 MiB: v7x headroom

    cost = pl.CostEstimate(
        flops=2 * m_valid * k_valid * c_valid,     # unpadded -> accurate hint
        transcendentals=0,
        bytes_accessed=(Mp * Kp * 2 + Kp * Cp * 2 + Cp * 4 + Mp * Cp * out_bytes
                        + (2 * nt * Cp * 4 if compute_stats else 0)))

    return pl.pallas_call(
        kernel,
        out_shape=out_shape,
        grid=(nt,),
        in_specs=in_specs,
        out_specs=out_specs,
        compiler_params=pltpu.CompilerParams(
            dimension_semantics=("parallel",),
            vmem_limit_bytes=vmem_bytes),
        cost_estimate=cost,
    )(patches, w2d, bias)


# ---------------------------------------------------------------------------
# Plain-JAX glue: im2col (kernel=3, padding=1) in NHWC
# ---------------------------------------------------------------------------
def im2col_nhwc(x, stride):
    N, H, W, C = x.shape
    Ho = (H + 2 - 3) // stride + 1
    Wo = (W + 2 - 3) // stride + 1
    xp = jnp.pad(x, ((0, 0), (1, 1), (1, 1), (0, 0)))
    cols = []
    for kh in range(3):
        for kw in range(3):
            cols.append(
                xp[:, kh:kh + (Ho - 1) * stride + 1:stride,
                      kw:kw + (Wo - 1) * stride + 1:stride, :])
    # K ordering: (kh*3 + kw)*C + c  -- matched by the weight reordering below.
    patches = jnp.concatenate(cols, axis=-1)            # [N, Ho, Wo, 9*C]
    return patches.reshape(N * Ho * Wo, 9 * C), (N, Ho, Wo)


def conv_block(x_nhwc, w_oihw, bias, stride, apply_relu, bn=None,
               in_scale=None, out_dtype=jnp.bfloat16):
    """Conv(3x3, pad=1) + bias (+ReLU) (+fused BN batch stats).

    Returns (activation, bn_scale_or_None).  A preceding BatchNorm's SCALE is
    folded into this conv's weights via `in_scale` (exact: zero padding times a
    scale is still zero); the corresponding additive shift was already applied
    to the incoming activation by the caller of the previous block.
    """
    Cout = w_oihw.shape[0]
    Cin = w_oihw.shape[1]
    patches, (N, Ho, Wo) = im2col_nhwc(x_nhwc, stride)
    M, K = patches.shape

    Kp = _round_up(K, KPACK)                 # sublane-pack padding only
    Cp = _round_up(Cout, LANE)
    # >=2 grid steps whenever M allows (v7x megacore); big tiles for v5e/v6e.
    tm = max(16, min(MAX_TM, _round_up(-(-M // 2), 16)))
    Mp = _round_up(M, tm)

    # bf16 MXU operands (f32 accumulation inside the kernel); zero padding keeps
    # the matmul exact; padded rows/channels are masked / sliced off.
    patches_p = jnp.pad(patches, ((0, Mp - M), (0, Kp - K))).astype(jnp.bfloat16)
    # [K, Cout] with k = (kh*3+kw)*Cin + c, matching the im2col ordering.
    w2d = jnp.transpose(w_oihw, (0, 2, 3, 1)).reshape(Cout, 9 * Cin).T
    if in_scale is not None:
        # Fold previous BatchNorm's per-input-channel scale into the weights.
        w2d = w2d * jnp.tile(in_scale, 9)[:, None]
    w2d = jnp.pad(w2d, ((0, Kp - K), (0, Cp - Cout))).astype(jnp.bfloat16)
    b2d = jnp.pad(bias.reshape(1, Cout),
                  ((0, 0), (0, Cp - Cout))).astype(jnp.float32)

    outs = conv_matmul_pallas(patches_p, w2d, b2d, apply_relu=apply_relu,
                              compute_stats=bn is not None,
                              m_valid=M, k_valid=K, c_valid=Cout,
                              tm=tm, out_dtype=out_dtype)
    if bn is None:
        y = outs
        scale = None
    else:
        y, psum, psq = outs
    y = y[:M, :Cout].reshape(N, Ho, Wo, Cout)

    if bn is not None:
        gamma, beta = bn
        s = jnp.sum(psum, axis=0)[0, :Cout]
        ss = jnp.sum(psq, axis=0)[0, :Cout]
        mean = s / M
        var = jnp.maximum(ss / M - mean * mean, 0.0)      # biased variance
        scale = gamma * jax.lax.rsqrt(var + BN_EPS)
        # BN(y) = y*scale + shift == (y + shift/scale) * scale.
        # Only the additive part is applied to the activation here (shift does
        # not commute with zero padding); the scale is folded into the NEXT
        # conv's weights by the caller.  (scale != 0 for any finite gamma != 0;
        # BatchNorm2d default gamma = 1 here.)
        act_shift = beta / scale - mean
        y = (y.astype(jnp.float32) + act_shift).astype(out_dtype)
    return y, scale


# ---------------------------------------------------------------------------
# ConvDis forward
# ---------------------------------------------------------------------------
def convdis_forward(x_nchw, p):
    x = jnp.transpose(x_nchw, (0, 2, 3, 1)).astype(jnp.float32)  # NCHW -> NHWC
    h, sc = conv_block(x, p["w1"], p["b1"], 2, True)
    h, sc = conv_block(h, p["w2"], p["b2"], 2, True,
                       bn=(p["g1"], p["be1"]), in_scale=sc)
    h, sc = conv_block(h, p["w3"], p["b3"], 1, True,
                       bn=(p["g2"], p["be2"]), in_scale=sc)
    h, sc = conv_block(h, p["w4"], p["b4"], 1, True,
                       bn=(p["g3"], p["be3"]), in_scale=sc)
    h, sc = conv_block(h, p["w5"], p["b5"], 2, True, in_scale=sc)
    h, _ = conv_block(h, p["w6"], p["b6"], 2, False, in_scale=sc,
                      out_dtype=jnp.float32)
    return jnp.transpose(h, (0, 3, 1, 2))  # NHWC -> NCHW


# ---------------------------------------------------------------------------
# Reference (mirrors the module; conv operands cast to bf16 with f32
# accumulation to match the MXU path used by the kernel)
# ---------------------------------------------------------------------------
def ref_forward(x, p):
    def conv(x, w, b, stride):
        y = jax.lax.conv_general_dilated(
            x.astype(jnp.bfloat16), w.astype(jnp.bfloat16),
            (stride, stride), ((1, 1), (1, 1)),
            dimension_numbers=("NCHW", "OIHW", "NCHW"),
            preferred_element_type=jnp.float32)
        return y + b.reshape(1, -1, 1, 1)

    def bn(x, g, be):
        mean = jnp.mean(x, axis=(0, 2, 3), keepdims=True)
        var = jnp.mean((x - mean) ** 2, axis=(0, 2, 3), keepdims=True)
        return ((x - mean) * jax.lax.rsqrt(var + BN_EPS)
                * g.reshape(1, -1, 1, 1) + be.reshape(1, -1, 1, 1))

    h = jax.nn.relu(conv(x, p["w1"], p["b1"], 2))
    h = jax.nn.relu(conv(h, p["w2"], p["b2"], 2))
    h = bn(h, p["g1"], p["be1"])
    h = jax.nn.relu(conv(h, p["w3"], p["b3"], 1))
    h = bn(h, p["g2"], p["be2"])
    h = jax.nn.relu(conv(h, p["w4"], p["b4"], 1))
    h = bn(h, p["g3"], p["be3"])
    h = jax.nn.relu(conv(h, p["w5"], p["b5"], 2))
    h = conv(h, p["w6"], p["b6"], 2)
    return h


# ---------------------------------------------------------------------------
def init_params(key, num_channels, num_features):
    ks = jax.random.split(key, 12)
    F_ = num_features
    C = num_channels

    def w(k, shape):
        return (0.1 * jax.random.normal(k, shape)).astype(jnp.float32)

    return {
        "w1": w(ks[0], (F_, C, 3, 3)),  "b1": w(ks[1], (F_,)),
        "w2": w(ks[2], (F_, F_, 3, 3)), "b2": w(ks[3], (F_,)),
        "w3": w(ks[4], (F_, F_, 3, 3)), "b3": w(ks[5], (F_,)),
        "w4": w(ks[6], (F_, F_, 3, 3)), "b4": w(ks[7], (F_,)),
        "w5": w(ks[8], (F_, F_, 3, 3)), "b5": w(ks[9], (F_,)),
        "w6": w(ks[10], (1, F_, 3, 3)), "b6": w(ks[11], (1,)),
        # BatchNorm2d default init: gamma = 1, beta = 0
        "g1": jnp.ones((F_,), jnp.float32), "be1": jnp.zeros((F_,), jnp.float32),
        "g2": jnp.ones((F_,), jnp.float32), "be2": jnp.zeros((F_,), jnp.float32),
        "g3": jnp.ones((F_,), jnp.float32), "be3": jnp.zeros((F_,), jnp.float32),
    }


if __name__ == "__main__":
    key = jax.random.PRNGKey(0)
    k_x, k_p = jax.random.split(key)

    N, C, H, W = 2, 4, 16, 16
    num_features = 32

    x = jax.random.normal(k_x, (N, C, H, W), dtype=jnp.float32)
    params = init_params(k_p, C, num_features)

    fwd = jax.jit(convdis_forward)
    ref = jax.jit(ref_forward)

    out = jax.block_until_ready(fwd(x, params))
    expect = jax.block_until_ready(ref(x, params))

    assert out.shape == (N, 1, 1, 1), out.shape
    assert jnp.allclose(out, expect, atol=2e-2, rtol=2e-2), (
        f"mismatch: max abs err {jnp.max(jnp.abs(out - expect))}")

    print("KERNEL_OK")
</pallas_src>

<mosaic_0001>
module attributes {stable_mosaic.version = 11 : i64} {
  func.func @_conv_kernel(%arg0: i32, %arg1: memref<64x48xbf16, #tpu.memory_space<vmem>>, %arg2: memref<48x128xbf16, #tpu.memory_space<vmem>>, %arg3: memref<1x128xf32, #tpu.memory_space<vmem>>, %arg4: memref<64x128xbf16, #tpu.memory_space<vmem>>) attributes {dimension_semantics = [#tpu.dimension_semantics<parallel>], iteration_bounds = array<i64: 2>, scalar_prefetch = 0 : i64, scratch_operands = 0 : i64, tpu.core_type = #tpu.core_type<tc>, window_params = [{transform_indices = @transform_0, window_bounds = array<i64: 64, 48>}, {pipeline_mode = #tpu.pipeline_mode<synchronous>, transform_indices = @transform_1, window_bounds = array<i64: 48, 128>}, {pipeline_mode = #tpu.pipeline_mode<synchronous>, transform_indices = @transform_2, window_bounds = array<i64: 1, 128>}, {transform_indices = @transform_3, window_bounds = array<i64: 64, 128>}]} {
    %c0 = arith.constant 0 : index
    %c0_0 = arith.constant 0 : index
    %0 = vector.load %arg1[%c0, %c0_0] : memref<64x48xbf16, #tpu.memory_space<vmem>>, vector<64x48xbf16>
    %c0_1 = arith.constant 0 : index
    %c0_2 = arith.constant 0 : index
    %1 = vector.load %arg2[%c0_1, %c0_2] : memref<48x128xbf16, #tpu.memory_space<vmem>>, vector<48x128xbf16>
    %cst = arith.constant dense<0.000000e+00> : vector<64x128xf32>
    %2 = tpu.matmul %0, %1, %cst {dimension_numbers = #tpu.dot_dimension_numbers<[1], [0], [0], [1], [0, 0, 1, 1], [], []>} : vector<64x48xbf16>, vector<48x128xbf16>, vector<64x128xf32> -> vector<64x128xf32>
    %c0_3 = arith.constant 0 : index
    %c0_4 = arith.constant 0 : index
    %3 = vector.load %arg3[%c0_3, %c0_4] : memref<1x128xf32, #tpu.memory_space<vmem>>, vector<1x128xf32>
    %4 = vector.broadcast %3 : vector<1x128xf32> to vector<64x128xf32>
    %5 = arith.addf %2, %4 : vector<64x128xf32>
    %cst_5 = arith.constant 0.000000e+00 : f32
    %6 = vector.broadcast %cst_5 : f32 to vector<64x128xf32>
    %7 = arith.maximumf %5, %6 : vector<64x128xf32>
    %8 = arith.truncf %7 : vector<64x128xf32> to vector<64x128xbf16>
    %c0_6 = arith.constant 0 : index
    %c0_7 = arith.constant 0 : index
    %9 = vector.load %arg4[%c0_6, %c0_7] : memref<64x128xbf16, #tpu.memory_space<vmem>>, vector<64x128xbf16>
    tpu.vector_store %arg4[%c0_6, %c0_7], %8 {strides = array<i32>} : memref<64x128xbf16, #tpu.memory_space<vmem>>, vector<64x128xbf16>,
    return
  }
  func.func @transform_0(%arg0: i32) -> (i32, i32) {
    %c0_i32 = arith.constant 0 : i32
    %c0_i32_0 = arith.constant 0 : i32
    return %arg0, %c0_i32 : i32, i32
  }
  func.func @transform_1(%arg0: i32) -> (i32, i32) {
    %c0_i32 = arith.constant 0 : i32
    %c0_i32_0 = arith.constant 0 : i32
    %c0_i32_1 = arith.constant 0 : i32
    return %c0_i32, %c0_i32_0 : i32, i32
  }
  func.func @transform_2(%arg0: i32) -> (i32, i32) {
    %c0_i32 = arith.constant 0 : i32
    %c0_i32_0 = arith.constant 0 : i32
    %c0_i32_1 = arith.constant 0 : i32
    return %c0_i32, %c0_i32_0 : i32, i32
  }
  func.func @transform_3(%arg0: i32) -> (i32, i32) {
    %c0_i32 = arith.constant 0 : i32
    %c0_i32_0 = arith.constant 0 : i32
    return %arg0, %c0_i32 : i32, i32
  }
}

module attributes {stable_mosaic.version = 11 : i64} {
  func.func @_conv_kernel(%arg0: i32, %arg1: memref<16x288xbf16, #tpu.memory_space<vmem>>, %arg2: memref<288x128xbf16, #tpu.memory_space<vmem>>, %arg3: memref<1x128xf32, #tpu.memory_space<vmem>>, %arg4: memref<16x128xbf16, #tpu.memory_space<vmem>>, %arg5: memref<1x1x128xf32, #tpu.memory_space<vmem>>, %arg6: memref<1x1x128xf32, #tpu.memory_space<vmem>>) attributes {dimension_semantics = [#tpu.dimension_semantics<parallel>], iteration_bounds = array<i64: 2>, scalar_prefetch = 0 : i64, scratch_operands = 0 : i64, tpu.core_type = #tpu.core_type<tc>, window_params = [{transform_indices = @transform_0, window_bounds = array<i64: 16, 288>}, {pipeline_mode = #tpu.pipeline_mode<synchronous>, transform_indices = @transform_1, window_bounds = array<i64: 288, 128>}, {pipeline_mode = #tpu.pipeline_mode<synchronous>, transform_indices = @transform_2, window_bounds = array<i64: 1, 128>}, {transform_indices = @transform_3, window_bounds = array<i64: 16, 128>}, {transform_indices = @transform_4, window_bounds = array<i64: 1, 1, 128>}, {transform_indices = @transform_5, window_bounds = array<i64: 1, 1, 128>}]} {
    %c0 = arith.constant 0 : index
    %c0_0 = arith.constant 0 : index
    %0 = vector.load %arg1[%c0, %c0_0] : memref<16x288xbf16, #tpu.memory_space<vmem>>, vector<16x288xbf16>
    %c0_1 = arith.constant 0 : index
    %c0_2 = arith.constant 0 : index
    %1 = vector.load %arg2[%c0_1, %c0_2] : memref<288x128xbf16, #tpu.memory_space<vmem>>, vector<288x128xbf16>
    %cst = arith.constant dense<0.000000e+00> : vector<16x128xf32>
    %2 = tpu.matmul %0, %1, %cst {dimension_numbers = #tpu.dot_dimension_numbers<[1], [0], [0], [1], [0, 0, 1, 1], [], []>} : vector<16x288xbf16>, vector<288x128xbf16>, vector<16x128xf32> -> vector<16x128xf32>
    %c0_3 = arith.constant 0 : index
    %c0_4 = arith.constant 0 : index
    %3 = vector.load %arg3[%c0_3, %c0_4] : memref<1x128xf32, #tpu.memory_space<vmem>>, vector<1x128xf32>
    %4 = vector.broadcast %3 : vector<1x128xf32> to vector<16x128xf32>
    %5 = arith.addf %2, %4 : vector<16x128xf32>
    %cst_5 = arith.constant 0.000000e+00 : f32
    %6 = vector.broadcast %cst_5 : f32 to vector<16x128xf32>
    %7 = arith.maximumf %5, %6 : vector<16x128xf32>
    %8 = arith.truncf %7 : vector<16x128xf32> to vector<16x128xbf16>
    %c0_6 = arith.constant 0 : index
    %c0_7 = arith.constant 0 : index
    %9 = vector.load %arg4[%c0_6, %c0_7] : memref<16x128xbf16, #tpu.memory_space<vmem>>, vector<16x128xbf16>
    tpu.vector_store %arg4[%c0_6, %c0_7], %8 {strides = array<i32>} : memref<16x128xbf16, #tpu.memory_space<vmem>>, vector<16x128xbf16>,
    %cst_8 = arith.constant dense<0.000000e+00> : vector<128xf32>
    %10 = vector.multi_reduction <add>, %7, %cst_8 [0] : vector<16x128xf32> to vector<128xf32>
    %11 = vector.shape_cast %10 : vector<128xf32> to vector<1x1x128xf32>
    %c0_9 = arith.constant 0 : index
    %c0_10 = arith.constant 0 : index
    %c0_11 = arith.constant 0 : index
    %12 = vector.load %arg5[%c0_9, %c0_10, %c0_11] : memref<1x1x128xf32, #tpu.memory_space<vmem>>, vector<1x1x128xf32>
    tpu.vector_store %arg5[%c0_9, %c0_10, %c0_11], %11 {strides = array<i32>} : memref<1x1x128xf32, #tpu.memory_space<vmem>>, vector<1x1x128xf32>,
    %13 = arith.mulf %7, %7 : vector<16x128xf32>
    %cst_12 = arith.constant dense<0.000000e+00> : vector<128xf32>
    %14 = vector.multi_reduction <add>, %13, %cst_12 [0] : vector<16x128xf32> to vector<128xf32>
    %15 = vector.shape_cast %14 : vector<128xf32> to vector<1x1x128xf32>
    %c0_13 = arith.constant 0 : index
    %c0_14 = arith.constant 0 : index
    %c0_15 = arith.constant 0 : index
    %16 = vector.load %arg6[%c0_13, %c0_14, %c0_15] : memref<1x1x128xf32, #tpu.memory_space<vmem>>, vector<1x1x128xf32>
    tpu.vector_store %arg6[%c0_13, %c0_14, %c0_15], %15 {strides = array<i32>} : memref<1x1x128xf32, #tpu.memory_space<vmem>>, vector<1x1x128xf32>,
    return
  }
  func.func @transform_0(%arg0: i32) -> (i32, i32) {
    %c0_i32 = arith.constant 0 : i32
    %c0_i32_0 = arith.constant 0 : i32
    return %arg0, %c0_i32 : i32, i32
  }
  func.func @transform_1(%arg0: i32) -> (i32, i32) {
    %c0_i32 = arith.constant 0 : i32
    %c0_i32_0 = arith.constant 0 : i32
    %c0_i32_1 = arith.constant 0 : i32
    return %c0_i32, %c0_i32_0 : i32, i32
  }
  func.func @transform_2(%arg0: i32) -> (i32, i32) {
    %c0_i32 = arith.constant 0 : i32
    %c0_i32_0 = arith.constant 0 : i32
    %c0_i32_1 = arith.constant 0 : i32
    return %c0_i32, %c0_i32_0 : i32, i32
  }
  func.func @transform_3(%arg0: i32) -> (i32, i32) {
    %c0_i32 = arith.constant 0 : i32
    %c0_i32_0 = arith.constant 0 : i32
    return %arg0, %c0_i32 : i32, i32
  }
  func.func @transform_4(%arg0: i32) -> (i32, i32, i32) {
    %c0_i32 = arith.constant 0 : i32
    %c0_i32_0 = arith.constant 0 : i32
    %c0_i32_1 = arith.constant 0 : i32
    return %arg0, %c0_i32, %c0_i32_0 : i32, i32, i32
  }
  func.func @transform_5(%arg0: i32) -> (i32, i32, i32) {
    %c0_i32 = arith.constant 0 : i32
    %c0_i32_0 = arith.constant 0 : i32
    %c0_i32_1 = arith.constant 0 : i32
    return %arg0, %c0_i32, %c0_i32_0 : i32, i32, i32
  }
}

module attributes {stable_mosaic.version = 11 : i64} {
  func.func @_conv_kernel(%arg0: i32, %arg1: memref<16x288xbf16, #tpu.memory_space<vmem>>, %arg2: memref<288x128xbf16, #tpu.memory_space<vmem>>, %arg3: memref<1x128xf32, #tpu.memory_space<vmem>>, %arg4: memref<16x128xbf16, #tpu.memory_space<vmem>>) attributes {dimension_semantics = [#tpu.dimension_semantics<parallel>], iteration_bounds = array<i64: 1>, scalar_prefetch = 0 : i64, scratch_operands = 0 : i64, tpu.core_type = #tpu.core_type<tc>, window_params = [{transform_indices = @transform_0, window_bounds = array<i64: 16, 288>}, {pipeline_mode = #tpu.pipeline_mode<synchronous>, transform_indices = @transform_1, window_bounds = array<i64: 288, 128>}, {pipeline_mode = #tpu.pipeline_mode<synchronous>, transform_indices = @transform_2, window_bounds = array<i64: 1, 128>}, {transform_indices = @transform_3, window_bounds = array<i64: 16, 128>}]} {
    %c0 = arith.constant 0 : index
    %c0_0 = arith.constant 0 : index
    %0 = vector.load %arg1[%c0, %c0_0] : memref<16x288xbf16, #tpu.memory_space<vmem>>, vector<16x288xbf16>
    %c0_1 = arith.constant 0 : index
    %c0_2 = arith.constant 0 : index
    %1 = vector.load %arg2[%c0_1, %c0_2] : memref<288x128xbf16, #tpu.memory_space<vmem>>, vector<288x128xbf16>
    %cst = arith.constant dense<0.000000e+00> : vector<16x128xf32>
    %2 = tpu.matmul %0, %1, %cst {dimension_numbers = #tpu.dot_dimension_numbers<[1], [0], [0], [1], [0, 0, 1, 1], [], []>} : vector<16x288xbf16>, vector<288x128xbf16>, vector<16x128xf32> -> vector<16x128xf32>
    %c0_3 = arith.constant 0 : index
    %c0_4 = arith.constant 0 : index
    %3 = vector.load %arg3[%c0_3, %c0_4] : memref<1x128xf32, #tpu.memory_space<vmem>>, vector<1x128xf32>
    %4 = vector.broadcast %3 : vector<1x128xf32> to vector<16x128xf32>
    %5 = arith.addf %2, %4 : vector<16x128xf32>
    %cst_5 = arith.constant 0.000000e+00 : f32
    %6 = vector.broadcast %cst_5 : f32 to vector<16x128xf32>
    %7 = arith.maximumf %5, %6 : vector<16x128xf32>
    %8 = arith.truncf %7 : vector<16x128xf32> to vector<16x128xbf16>
    %c0_6 = arith.constant 0 : index
    %c0_7 = arith.constant 0 : index
    %9 = vector.load %arg4[%c0_6, %c0_7] : memref<16x128xbf16, #tpu.memory_space<vmem>>, vector<16x128xbf16>
    tpu.vector_store %arg4[%c0_6, %c0_7], %8 {strides = array<i32>} : memref<16x128xbf16, #tpu.memory_space<vmem>>, vector<16x128xbf16>,
    return
  }
  func.func @transform_0(%arg0: i32) -> (i32, i32) {
    %c0_i32 = arith.constant 0 : i32
    %c0_i32_0 = arith.constant 0 : i32
    return %arg0, %c0_i32 : i32, i32
  }
  func.func @transform_1(%arg0: i32) -> (i32, i32) {
    %c0_i32 = arith.constant 0 : i32
    %c0_i32_0 = arith.constant 0 : i32
    %c0_i32_1 = arith.constant 0 : i32
    return %c0_i32, %c0_i32_0 : i32, i32
  }
  func.func @transform_2(%arg0: i32) -> (i32, i32) {
    %c0_i32 = arith.constant 0 : i32
    %c0_i32_0 = arith.constant 0 : i32
    %c0_i32_1 = arith.constant 0 : i32
    return %c0_i32, %c0_i32_0 : i32, i32
  }
  func.func @transform_3(%arg0: i32) -> (i32, i32) {
    %c0_i32 = arith.constant 0 : i32
    %c0_i32_0 = arith.constant 0 : i32
    return %arg0, %c0_i32 : i32, i32
  }
}

module attributes {stable_mosaic.version = 11 : i64} {
  func.func @_conv_kernel(%arg0: i32, %arg1: memref<16x288xbf16, #tpu.memory_space<vmem>>, %arg2: memref<288x128xbf16, #tpu.memory_space<vmem>>, %arg3: memref<1x128xf32, #tpu.memory_space<vmem>>, %arg4: memref<16x128xf32, #tpu.memory_space<vmem>>) attributes {dimension_semantics = [#tpu.dimension_semantics<parallel>], iteration_bounds = array<i64: 1>, scalar_prefetch = 0 : i64, scratch_operands = 0 : i64, tpu.core_type = #tpu.core_type<tc>, window_params = [{transform_indices = @transform_0, window_bounds = array<i64: 16, 288>}, {pipeline_mode = #tpu.pipeline_mode<synchronous>, transform_indices = @transform_1, window_bounds = array<i64: 288, 128>}, {pipeline_mode = #tpu.pipeline_mode<synchronous>, transform_indices = @transform_2, window_bounds = array<i64: 1, 128>}, {transform_indices = @transform_3, window_bounds = array<i64: 16, 128>}]} {
    %c0 = arith.constant 0 : index
    %c0_0 = arith.constant 0 : index
    %0 = vector.load %arg1[%c0, %c0_0] : memref<16x288xbf16, #tpu.memory_space<vmem>>, vector<16x288xbf16>
    %c0_1 = arith.constant 0 : index
    %c0_2 = arith.constant 0 : index
    %1 = vector.load %arg2[%c0_1, %c0_2] : memref<288x128xbf16, #tpu.memory_space<vmem>>, vector<288x128xbf16>
    %cst = arith.constant dense<0.000000e+00> : vector<16x128xf32>
    %2 = tpu.matmul %0, %1, %cst {dimension_numbers = #tpu.dot_dimension_numbers<[1], [0], [0], [1], [0, 0, 1, 1], [], []>} : vector<16x288xbf16>, vector<288x128xbf16>, vector<16x128xf32> -> vector<16x128xf32>
    %c0_3 = arith.constant 0 : index
    %c0_4 = arith.constant 0 : index
    %3 = vector.load %arg3[%c0_3, %c0_4] : memref<1x128xf32, #tpu.memory_space<vmem>>, vector<1x128xf32>
    %4 = vector.broadcast %3 : vector<1x128xf32> to vector<16x128xf32>
    %5 = arith.addf %2, %4 : vector<16x128xf32>
    %c0_5 = arith.constant 0 : index
    %c0_6 = arith.constant 0 : index
    %6 = vector.load %arg4[%c0_5, %c0_6] : memref<16x128xf32, #tpu.memory_space<vmem>>, vector<16x128xf32>
    tpu.vector_store %arg4[%c0_5, %c0_6], %5 {strides = array<i32>} : memref<16x128xf32, #tpu.memory_space<vmem>>, vector<16x128xf32>,
    return
  }
  func.func @transform_0(%arg0: i32) -> (i32, i32) {
    %c0_i32 = arith.constant 0 : i32
    %c0_i32_0 = arith.constant 0 : i32
    return %arg0, %c0_i32 : i32, i32
  }
  func.func @transform_1(%arg0: i32) -> (i32, i32) {
    %c0_i32 = arith.constant 0 : i32
    %c0_i32_0 = arith.constant 0 : i32
    %c0_i32_1 = arith.constant 0 : i32
    return %c0_i32, %c0_i32_0 : i32, i32
  }
  func.func @transform_2(%arg0: i32) -> (i32, i32) {
    %c0_i32 = arith.constant 0 : i32
    %c0_i32_0 = arith.constant 0 : i32
    %c0_i32_1 = arith.constant 0 : i32
    return %c0_i32, %c0_i32_0 : i32, i32
  }
  func.func @transform_3(%arg0: i32) -> (i32, i32) {
    %c0_i32 = arith.constant 0 : i32
    %c0_i32_0 = arith.constant 0 : i32
    return %arg0, %c0_i32 : i32, i32
  }
}

</mosaic_0001>

<llo_original>
// kernel: convdis_forward.6
$region0: #{convdis_forward.6}
  #allocation0 [shape = 'u32[]', space=smem, size = 0x4, offset = 0x4, fixed_abs, tag = 'smem constant byte address 0x4 - core index']
  #allocation1 [shape = 'u32[72,128]{1,0:T(1,128)}', space=vmem, size = 0x9000, scoped, tag = 'internal scratch']
  %s0 = inlined_call_operand.vmem [shape: bf16[128,48], index: 0, kind: input, shape index: {}]
  %s1 = inlined_call_operand.vmem [shape: bf16[48,128], index: 1, kind: input, shape index: {}]
  %s2 = inlined_call_operand.vmem [shape: f32[1,128], index: 2, kind: input, shape index: {}]
  %s3 = inlined_call_operand.vmem [shape: bf16[128,128], index: 3, kind: output, shape index: {}]
  %s4 = sld [smem:[#allocation0]]
  $region45: #{convdis_forward.6} parent=0
    _
  %s6 = ssub.s32 1, %s4
  %s7 = scalar_select 0, %s6, %s4
  loop: start=0, step=1, limit=4
  $region2: #{convdis_forward.6} parent=0 // loop_pre_header
    _
  $region3: #{convdis_forward.6} parent=0 // loop_header
    %s9 = sphi 0, %s13
    %p10 = scmp.ge.s32.totalorder %s9, 4
    %s19 = sphi 0, %s21
    %s22 = sphi 0, %s19
    %s23 = sphi 0, %s22
    %s39 = sphi 0, %s23
    %s43 = sphi 0, %s43
    %s45 = sphi 0, %s43
    %s46 = sphi 0, %s45
    %s60 = sphi 0, %s46
    %s64 = sphi 0, %s64
    %s66 = sphi 0, %s64
    %s67 = sphi 0, %s66
    %s81 = sphi 0, %s67
    %s87 = sphi 0, %s89
    %s90 = sphi 0, %s87
    %s91 = sphi 0, %s90
    %s107 = sphi 0, %s91
  $region4: #{convdis_forward.6} parent=0 // loop_header_branch
    %12 = sbr.rel (%p10) target = $region8
  $region5: #{convdis_forward.6} parent=0 // loop_body
    %s14 = ssub.s32 %s9, 1
    %s15 = ssub.s32 %s9, 2
    %s16 = sadd.s32 %s9, 1
    %s17 = ssub.s32 %s9, %s16
    %p18 = scmp.eq.s32.totalorder %s17, 0
    %s20 = sadd.s32 %s19, 1
    %s21 = scalar_select %p18, %s19, %s20
    %p24 = pneg %p18
    %p25 = scmp.eq.s32.totalorder %s9, 1
    %p26 = por %p24, %p25
    %p27 = scmp.ne.s32.totalorder %s19, %s22
    %p28 = scmp.eq.s32.totalorder %s9, 0
    %p29 = por %p27, %p28
    %p30 = scmp.ne.s32.totalorder %s19, %s22
    %p31 = scmp.eq.s32.totalorder %s14, 1
    %p32 = por %p30, %p31
    %p33 = scmp.ne.s32.totalorder %s22, %s23
    %p34 = scmp.eq.s32.totalorder %s14, 0
    %p35 = por %p33, %p34
    %p36 = scmp.ne.s32.totalorder %s22, %s23
    %p37 = scmp.eq.s32.totalorder %s15, 1
    %p38 = por %p36, %p37
    %p40 = scmp.ne.s32.totalorder %s23, %s39
    %p41 = scmp.eq.s32.totalorder %s15, 0
    %p42 = por %p40, %p41
    %s44 = sadd.s32 %s43, 1
    %p47 = scmp.eq.s32.totalorder %s9, 1
    %p48 = scmp.ne.s32.totalorder %s43, %s45
    %p49 = scmp.eq.s32.totalorder %s9, 0
    %p50 = por %p48, %p49
    %p51 = scmp.ne.s32.totalorder %s43, %s45
    %p52 = scmp.eq.s32.totalorder %s14, 1
    %p53 = por %p51, %p52
    %p54 = scmp.ne.s32.totalorder %s45, %s46
    %p55 = scmp.eq.s32.totalorder %s14, 0
    %p56 = por %p54, %p55
    %p57 = scmp.ne.s32.totalorder %s45, %s46
    %p58 = scmp.eq.s32.totalorder %s15, 1
    %p59 = por %p57, %p58
    %p61 = scmp.ne.s32.totalorder %s46, %s60
    %p62 = scmp.eq.s32.totalorder %s15, 0
    %p63 = por %p61, %p62
    %s65 = sadd.s32 %s64, 1
    %p68 = scmp.eq.s32.totalorder %s9, 1
    %p69 = scmp.ne.s32.totalorder %s64, %s66
    %p70 = scmp.eq.s32.totalorder %s9, 0
    %p71 = por %p69, %p70
    %p72 = scmp.ne.s32.totalorder %s64, %s66
    %p73 = scmp.eq.s32.totalorder %s14, 1
    %p74 = por %p72, %p73
    %p75 = scmp.ne.s32.totalorder %s66, %s67
    %p76 = scmp.eq.s32.totalorder %s14, 0
    %p77 = por %p75, %p76
    %p78 = scmp.ne.s32.totalorder %s66, %s67
    %p79 = scmp.eq.s32.totalorder %s15, 1
    %p80 = por %p78, %p79
    %p82 = scmp.ne.s32.totalorder %s67, %s81
    %p83 = scmp.eq.s32.totalorder %s15, 0
    %p84 = por %p82, %p83
    %s85 = ssub.s32 %s9, %s16
    %p86 = scmp.eq.s32.totalorder %s85, 0
    %s88 = sadd.s32 %s87, 1
    %s89 = scalar_select %p86, %s87, %s88
    %p92 = pneg %p86
    %p93 = scmp.eq.s32.totalorder %s9, 1
    %p94 = por %p92, %p93
    %p95 = scmp.ne.s32.totalorder %s87, %s90
    %p96 = scmp.eq.s32.totalorder %s9, 0
    %p97 = por %p95, %p96
    %p98 = scmp.ne.s32.totalorder %s87, %s90
    %p99 = scmp.eq.s32.totalorder %s14, 1
    %p100 = por %p98, %p99
    %p101 = scmp.ne.s32.totalorder %s90, %s91
    %p102 = scmp.eq.s32.totalorder %s14, 0
    %p103 = por %p101, %p102
    %p104 = scmp.ne.s32.totalorder %s90, %s91
    %p105 = scmp.eq.s32.totalorder %s15, 1
    %p106 = por %p104, %p105
    %p108 = scmp.ne.s32.totalorder %s91, %s107
    %p109 = scmp.eq.s32.totalorder %s15, 0
    %p110 = por %p108, %p109
    %p111 = scmp.le.s32.totalorder 1, %s9
    %p112 = scmp.lt.s32.totalorder %s9, 3
    %p113 = pnand %p111, %p112
    %p114 = pneg %p113
    // Predicated region
    $region9: #{convdis_forward.6} parent=5 // pred_check
      _
    $region10: #{convdis_forward.6} parent=5 // pred_check_branch
      %116 = sbr.rel (%p113) target = $region12
    $region11: #{convdis_forward.6} parent=5 // pred_region
      %s117 = ssub.s32 %s9, 1
      // Predicated region
      $region13: #{convdis_forward.6} parent=11 // pred_check
        %p118 = pneg %p56
      $region14: #{convdis_forward.6} parent=11 // pred_check_branch
        %120 = sbr.rel (%p118) target = $region16
      $region15: #{convdis_forward.6} parent=11 // pred_region
        _
      $region16: #{convdis_forward.6} parent=11 // pred_fallthru
        _
      // Predicated region
      $region17: #{convdis_forward.6} parent=11 // pred_check
        %p121 = pneg %p77
      $region18: #{convdis_forward.6} parent=11 // pred_check_branch
        %123 = sbr.rel (%p121) target = $region20
      $region19: #{convdis_forward.6} parent=11 // pred_region
        _
      $region20: #{convdis_forward.6} parent=11 // pred_fallthru
        _
    $region12: #{convdis_forward.6} parent=5 // pred_fallthru
      _
    %p124 = scmp.lt.s32.totalorder %s9, 2
    // Predicated region
    $region21: #{convdis_forward.6} parent=5 // pred_check
      %p125 = pneg %p124
    $region22: #{convdis_forward.6} parent=5 // pred_check_branch
      %127 = sbr.rel (%p125) target = $region24
    $region23: #{convdis_forward.6} parent=5 // pred_region
      // Predicated region
      $region25: #{convdis_forward.6} parent=23 // pred_check
        %p128 = pneg %p29
      $region26: #{convdis_forward.6} parent=23 // pred_check_branch
        %130 = sbr.rel (%p128) target = $region28
      $region27: #{convdis_forward.6} parent=23 // pred_region
        %s131 = smul.u32 8, %s9
        %p132 = scmp.lt.s32.totalorder %s131, 15
        %s133 = scalar_select %p132, %s131, 15
        %s134 = smul.addr %s133, 4
        %s135 = scalar_lea.vmem %s0, %s134
        %s136 = smul.u32 8, %s9
      $region28: #{convdis_forward.6} parent=23 // pred_fallthru
        _
    $region24: #{convdis_forward.6} parent=5 // pred_fallthru
      _
    %p137 = scmp.le.s32.totalorder 1, %s9
    %p138 = scmp.lt.s32.totalorder %s9, 3
    %p139 = pnand %p137, %p138
    %p140 = pneg %p139
    // Predicated region
    $region29: #{convdis_forward.6} parent=5 // pred_check
      _
    $region30: #{convdis_forward.6} parent=5 // pred_check_branch
      %142 = sbr.rel (%p139) target = $region32
    $region31: #{convdis_forward.6} parent=5 // pred_region
      %s143 = ssub.s32 %s9, 1
      %s144 = smul.u32 8, %s14
      %p145 = scmp.lt.s32.totalorder %s144, 15
      %s146 = scalar_select %p145, %s144, 15
      %s147 = smul.addr %s146, 4
      %s148 = scalar_lea.vmem %s0, %s147
      %p149 = pneg %p35
      %p150 = pneg %p32
      %p151 = pneg %p56
      %p152 = pneg %p53
      %p153 = pneg %p77
      %p154 = pneg %p74
      %p155 = pneg %p103
      %p156 = pneg %p100
      %s157 = smul.u32 8, %s14
      %p158 = scmp.lt.s32.totalorder %s157, 15
      %s159 = scalar_select %p158, %s157, 15
      %s160 = smul.addr %s159, 4
      %s161 = scalar_lea.vmem %s3, %s160
      %s162 = smul.u32 8, %s14
      %p163 = scmp.lt.s32.totalorder %s162, 15
      %s164 = scalar_select %p163, %s162, 15
      %s165 = smul.addr %s164, 4
      %s166 = scalar_lea.vmem %s0, %s165
      %s167 = smul.u32 8, %s14
      %s168 = smul.u32 8, %s14
      %p169 = scmp.lt.s32.totalorder %s168, 15
      %s170 = scalar_select %p169, %s168, 15
      %s171 = smul.addr %s170, 4
      %s172 = scalar_lea.vmem %s3, %s171
      %s173 = smul.u32 8, %s14
      %v175 = vld [vmem:[%s166] sm:$0xf]
      %v176 = vld [vmem:[%s166 + $0x4] sm:$0xf]
      %v177 = vld [vmem:[%s166 + $0x8] sm:$0xf]
      %v178 = vld [vmem:[%s166 + $0xc] sm:$0xf]
      %v179 = vld [vmem:[%s166 + $0x10] sm:$0xf]
      %v180 = vld [vmem:[%s166 + $0x14] sm:$0xf]
      %v181 = vld [vmem:[%s166 + $0x18] sm:$0xf]
      %v182 = vld [vmem:[%s166 + $0x1c] sm:$0xf]
      %v183 = vld [vmem:[%s1] sm:$0xf]
      %v184 = vld [vmem:[%s1 + $0x4] sm:$0xf]
      %v185 = vld [vmem:[%s1 + $0x8] sm:$0xf]
      %v186 = vld [vmem:[%s1 + $0xc] sm:$0xf]
      %v187 = vld [vmem:[%s1 + $0x10] sm:$0xf]
      %v188 = vld [vmem:[%s1 + $0x14] sm:$0xf]
      %v189 = vld [vmem:[%s2] sm:$0x1]
      %v191 = vperm.slane %v189, 0
      %v201 = vunpack.c.l.b16 %v175
      %v202 = vunpack.c.l.b16 %v176
      %v203 = vunpack.c.l.b16 %v177
      %v204 = vunpack.c.l.b16 %v178
      %v205 = vunpack.c.l.b16 %v179
      %v206 = vunpack.c.l.b16 %v180
      %v207 = vunpack.c.l.b16 %v181
      %v208 = vunpack.c.l.b16 %v182
      %v209 = vpack.c.b16 %v202, %v201
      %v210 = vpack.c.b16 %v204, %v203
      %v211 = vpack.c.b16 %v206, %v205
      %v212 = vpack.c.b16 %v208, %v207
      %v219 = vunpack.c.l.b16 %v183
      %v220 = vunpack.c.l.b16 %v184
      %v221 = vunpack.c.l.b16 %v185
      %v222 = vunpack.c.l.b16 %v186
      %v223 = vunpack.c.l.b16 %v187
      %v224 = vunpack.c.l.b16 %v188
      %v225 = vpack.c.b16 %v220, %v219
      %v226 = vpack.c.b16 %v222, %v221
      %v227 = vpack.c.b16 %v224, %v223
      %vm231 = vcmask 392192
      %v233 = vsel %vm231, %v209, 0
      %v236 = vsel %vm231, %v210, 0
      %v239 = vsel %vm231, %v211, 0
      %v242 = vsel %vm231, %v212, 0
      %244 = vmatpush.bf16.msra.mxu0 0
      %245 = vmatpush.bf16.msra.mxu0 0
      %246 = vmatpush.bf16.msra.mxu0 0
      %247 = vmatpush.bf16.msra.mxu0 0
      %248 = vmatpush.bf16.msra.mxu0 0
      %249 = vmatpush.bf16.msra.mxu0 %v227
      %250 = vmatpush.bf16.msra.mxu0 %v226
      %251 = vmatpush.bf16.msra.mxu0 %v225
      %252 = vmatmul.bf16.gmra.mxu0 %v233
      %v253 = vpop.f32.mrf.mxu0
      %v254 = vadd.f32 %v191, %v253
      %v255 = vpop.f32.mrf.mxu0
      %v256 = vadd.f32 %v191, %v255
      %257 = vmatmul.bf16.gmra.mxu0 %v236
      %v258 = vpop.f32.mrf.mxu0
      %v259 = vadd.f32 %v191, %v258
      %v260 = vpop.f32.mrf.mxu0
      %v261 = vadd.f32 %v191, %v260
      %262 = vmatmul.bf16.gmra.mxu0 %v239
      %v263 = vpop.f32.mrf.mxu0
      %v264 = vadd.f32 %v191, %v263
      %v265 = vpop.f32.mrf.mxu0
      %v266 = vadd.f32 %v191, %v265
      %267 = vmatmul.bf16.gmra.mxu0 %v242
      %v268 = vpop.f32.mrf.mxu0
      %v269 = vadd.f32 %v191, %v268
      %v270 = vpop.f32.mrf.mxu0
      %v271 = vadd.f32 %v191, %v270
      %272 = vdwg.mxu0
      %v273 = vmax.f32 %v254, 0.0
      %v274 = vmax.f32 %v256, 0.0
      %v275 = vmax.f32 %v259, 0.0
      %v276 = vmax.f32 %v261, 0.0
      %v277 = vmax.f32 %v264, 0.0
      %v278 = vmax.f32 %v266, 0.0
      %v279 = vmax.f32 %v269, 0.0
      %v280 = vmax.f32 %v271, 0.0
      %v281 = vpack.c.bf16 %v273, %v273
      %v282 = vpack.c.bf16 %v274, %v274
      %v283 = vpack.c.bf16 %v275, %v275
      %v284 = vpack.c.bf16 %v276, %v276
      %v285 = vpack.c.bf16 %v277, %v277
      %v286 = vpack.c.bf16 %v278, %v278
      %v287 = vpack.c.bf16 %v279, %v279
      %v288 = vpack.c.bf16 %v280, %v280
      %289 = vst [vmem:[%s172] sm:$0xf] %v281
      %290 = vst [vmem:[%s172 + $0x4] sm:$0xf] %v282
      %291 = vst [vmem:[%s172 + $0x8] sm:$0xf] %v283
      %292 = vst [vmem:[%s172 + $0xc] sm:$0xf] %v284
      %293 = vst [vmem:[%s172 + $0x10] sm:$0xf] %v285
      %294 = vst [vmem:[%s172 + $0x14] sm:$0xf] %v286
      %295 = vst [vmem:[%s172 + $0x18] sm:$0xf] %v287
      %296 = vst [vmem:[%s172 + $0x1c] sm:$0xf] %v288
      %s297 = smul.u32 8, %s14
      %p298 = scmp.lt.s32.totalorder %s297, 15
      %s299 = scalar_select %p298, %s297, 15
      %s300 = smul.addr %s299, 4
      %s301 = scalar_lea.vmem %s3, %s300
      // Predicated region
      $region33: #{convdis_forward.6} parent=31 // pred_check
        %p302 = pneg %p100
      $region34: #{convdis_forward.6} parent=31 // pred_check_branch
        %304 = sbr.rel (%p302) target = $region36
      $region35: #{convdis_forward.6} parent=31 // pred_region
        %s305 = smul.u32 8, %s14
      $region36: #{convdis_forward.6} parent=31 // pred_fallthru
        _
    $region32: #{convdis_forward.6} parent=5 // pred_fallthru
      _
    %p306 = scmp.le.s32.totalorder 2, %s9
    // Predicated region
    $region37: #{convdis_forward.6} parent=5 // pred_check
      %p307 = pneg %p306
    $region38: #{convdis_forward.6} parent=5 // pred_check_branch
      %309 = sbr.rel (%p307) target = $region40
    $region39: #{convdis_forward.6} parent=5 // pred_region
      %s310 = ssub.s32 %s9, 2
      // Predicated region
      $region41: #{convdis_forward.6} parent=39 // pred_check
        %p311 = pneg %p106
      $region42: #{convdis_forward.6} parent=39 // pred_check_branch
        %313 = sbr.rel (%p311) target = $region44
      $region43: #{convdis_forward.6} parent=39 // pred_region
        %s314 = smul.u32 8, %s15
        %p315 = scmp.lt.s32.totalorder %s314, 15
        %s316 = scalar_select %p315, %s314, 15
        %s317 = smul.addr %s316, 4
        %s318 = scalar_lea.vmem %s3, %s317
      $region44: #{convdis_forward.6} parent=39 // pred_fallthru
        _
    $region40: #{convdis_forward.6} parent=5 // pred_fallthru
      _
  $region6: #{convdis_forward.6} parent=0 // loop_footer
    %s13 = sadd.s32 1, %s9
  $region7: #{convdis_forward.6} parent=0 // loop_footer_branch
    %8 = sbr.rel target = $region3
  $region8: #{convdis_forward.6} parent=0 // loop_exit
    _

// kernel: tile.18
$region0: #{tile.18}
  #allocation0 [shape = 's32[1]{0}', space=sflag, size = 0x4, scoped, tag = 'scoped memory for tile.18']
  %s0 = inlined_call_operand.vmem [shape: f32[32], index: 0, kind: input, shape index: {}]
  %s1 = inlined_call_operand.vmem [shape: f32[9,32], index: 1, kind: output, shape index: {}]
  // Predicated region
  $region2: #{tile.18} parent=0 // pred_check
    _
  $region3: #{tile.18} parent=0 // pred_check_branch
    %3 = sbr.rel (0) target = $region5
  $region4: #{tile.18} parent=0 // pred_region
    _
  $region5: #{tile.18} parent=0 // pred_fallthru
    _
  %v4 = vld [vmem:[%s0] ss:$0 sm:$0xff]
  %5 = vst [vmem:[%s1] sm:$0xff] %v4
  %s6 = scalar_lea.vmem %s1, 8
  %7 = vst [vmem:[%s6] sm:$0xff] %v4

// kernel: mul.21
$region0: #{mul.21}
  %s0 = inlined_call_operand.vmem [shape: f32[9,32], index: 0, kind: input, shape index: {}]
  %s1 = inlined_call_operand.vmem [shape: f32[288], index: 1, kind: output, shape index: {}]
  $region1: #{mul.21} parent=0
    #allocation0 [shape = 'u8[4096]{0}', space=vmem, size = 0x1000, scoped, tag = 'scoped mem for output reshape']
    %v2 = vld [vmem:[%s0] ss:$4 sm:$0x7]
    %vm3 = vcmask 261120
    %4 = vst.msk [vmem:[#allocation0] sm:$0x7] %vm3, %v2
    %s5 = scalar_lea.vmem %s0, 3
    %s6 = smov 3
    %v7 = vld [vmem:[%s5] ss:$4 sm:%s6]
    %8 = vrot.lane.b32.xlu0 %v7, 96
    %v9 = vpop.permute.xlu0 %8
    %vm10 = vcmask 1048320
    %11 = vst.msk [vmem:[#allocation0] sm:$0x3] %vm10, %v9
    %s12 = scalar_lea.vmem %s0, 2
    %s13 = smov 3
    %v14 = vld [vmem:[%s12] ss:$4 sm:%s13]
    %15 = vrot.lane.b32.xlu0 %v14, 64
    %v16 = vpop.permute.xlu0 %15
    %vm17 = vcmask 785920
    %18 = vst.msk [vmem:[#allocation0] sm:$0x3] %vm17, %v16
    %s19 = scalar_lea.vmem %s0, 1
    %s20 = smov 3
    %v21 = vld [vmem:[%s19] ss:$4 sm:%s20]
    %22 = vrot.lane.b32.xlu0 %v21, 32
    %v23 = vpop.permute.xlu0 %22
    %vm24 = vcmask 523520
    %25 = vst.msk [vmem:[#allocation0] sm:$0x3] %vm24, %v23
    %s27 = ssub.s32 16, 1
    %v28 = vld [vmem:[#allocation0] sm:%s27]
    %s30 = ssub.s32 16, 1
    %31 = vst [vmem:[%s1] sm:%s30] %v28

// kernel: convdis_forward.7
$region0: #{convdis_forward.7}
  #allocation0 [shape = 'u32[]', space=smem, size = 0x4, offset = 0x4, fixed_abs, tag = 'smem constant byte address 0x4 - core index']
  #allocation1 [shape = 'u32[72,128]{1,0:T(1,128)}', space=vmem, size = 0x9000, scoped, tag = 'internal scratch']
  %s0 = inlined_call_operand.vmem [shape: bf16[32,288], index: 0, kind: input, shape index: {}]
  %s1 = inlined_call_operand.vmem [shape: bf16[288,128], index: 1, kind: input, shape index: {}]
  %s2 = inlined_call_operand.vmem [shape: f32[1,128], index: 2, kind: input, shape index: {}]
  %s3 = inlined_call_operand.vmem [shape: bf16[32,128], index: 3, kind: output, shape index: {0}]
  %s4 = inlined_call_operand.vmem [shape: f32[2,1,128], index: 4, kind: output, shape index: {1}]
  %s5 = inlined_call_operand.vmem [shape: f32[2,1,128], index: 5, kind: output, shape index: {2}]
  %6 = xla_tuple %s3, %s4, %s5
  %s7 = sld [smem:[#allocation0]]
  $region61: #{convdis_forward.7} parent=0
    _
  %s9 = ssub.s32 1, %s7
  %s10 = scalar_select 0, %s9, %s7
  loop: start=0, step=1, limit=4
  $region2: #{convdis_forward.7} parent=0 // loop_pre_header
    _
  $region3: #{convdis_forward.7} parent=0 // loop_header
    %s12 = sphi 0, %s16
    %p13 = scmp.ge.s32.totalorder %s12, 4
    %s22 = sphi 0, %s24
    %s25 = sphi 0, %s22
    %s26 = sphi 0, %s25
    %s42 = sphi 0, %s26
    %s46 = sphi 0, %s46
    %s48 = sphi 0, %s46
    %s49 = sphi 0, %s48
    %s63 = sphi 0, %s49
    %s67 = sphi 0, %s67
    %s69 = sphi 0, %s67
    %s70 = sphi 0, %s69
    %s84 = sphi 0, %s70
    %s90 = sphi 0, %s92
    %s93 = sphi 0, %s90
    %s94 = sphi 0, %s93
    %s110 = sphi 0, %s94
    %s116 = sphi 0, %s118
    %s119 = sphi 0, %s116
    %s120 = sphi 0, %s119
    %s136 = sphi 0, %s120
    %s142 = sphi 0, %s144
    %s145 = sphi 0, %s142
    %s146 = sphi 0, %s145
    %s162 = sphi 0, %s146
  $region4: #{convdis_forward.7} parent=0 // loop_header_branch
    %15 = sbr.rel (%p13) target = $region8
  $region5: #{convdis_forward.7} parent=0 // loop_body
    %s17 = ssub.s32 %s12, 1
    %s18 = ssub.s32 %s12, 2
    %s19 = sadd.s32 %s12, 1
    %s20 = ssub.s32 %s12, %s19
    %p21 = scmp.eq.s32.totalorder %s20, 0
    %s23 = sadd.s32 %s22, 1
    %s24 = scalar_select %p21, %s22, %s23
    %p27 = pneg %p21
    %p28 = scmp.eq.s32.totalorder %s12, 1
    %p29 = por %p27, %p28
    %p30 = scmp.ne.s32.totalorder %s22, %s25
    %p31 = scmp.eq.s32.totalorder %s12, 0
    %p32 = por %p30, %p31
    %p33 = scmp.ne.s32.totalorder %s22, %s25
    %p34 = scmp.eq.s32.totalorder %s17, 1
    %p35 = por %p33, %p34
    %p36 = scmp.ne.s32.totalorder %s25, %s26
    %p37 = scmp.eq.s32.totalorder %s17, 0
    %p38 = por %p36, %p37
    %p39 = scmp.ne.s32.totalorder %s25, %s26
    %p40 = scmp.eq.s32.totalorder %s18, 1
    %p41 = por %p39, %p40
    %p43 = scmp.ne.s32.totalorder %s26, %s42
    %p44 = scmp.eq.s32.totalorder %s18, 0
    %p45 = por %p43, %p44
    %s47 = sadd.s32 %s46, 1
    %p50 = scmp.eq.s32.totalorder %s12, 1
    %p51 = scmp.ne.s32.totalorder %s46, %s48
    %p52 = scmp.eq.s32.totalorder %s12, 0
    %p53 = por %p51, %p52
    %p54 = scmp.ne.s32.totalorder %s46, %s48
    %p55 = scmp.eq.s32.totalorder %s17, 1
    %p56 = por %p54, %p55
    %p57 = scmp.ne.s32.totalorder %s48, %s49
    %p58 = scmp.eq.s32.totalorder %s17, 0
    %p59 = por %p57, %p58
    %p60 = scmp.ne.s32.totalorder %s48, %s49
    %p61 = scmp.eq.s32.totalorder %s18, 1
    %p62 = por %p60, %p61
    %p64 = scmp.ne.s32.totalorder %s49, %s63
    %p65 = scmp.eq.s32.totalorder %s18, 0
    %p66 = por %p64, %p65
    %s68 = sadd.s32 %s67, 1
    %p71 = scmp.eq.s32.totalorder %s12, 1
    %p72 = scmp.ne.s32.totalorder %s67, %s69
    %p73 = scmp.eq.s32.totalorder %s12, 0
    %p74 = por %p72, %p73
    %p75 = scmp.ne.s32.totalorder %s67, %s69
    %p76 = scmp.eq.s32.totalorder %s17, 1
    %p77 = por %p75, %p76
    %p78 = scmp.ne.s32.totalorder %s69, %s70
    %p79 = scmp.eq.s32.totalorder %s17, 0
    %p80 = por %p78, %p79
    %p81 = scmp.ne.s32.totalorder %s69, %s70
    %p82 = scmp.eq.s32.totalorder %s18, 1
    %p83 = por %p81, %p82
    %p85 = scmp.ne.s32.totalorder %s70, %s84
    %p86 = scmp.eq.s32.totalorder %s18, 0
    %p87 = por %p85, %p86
    %s88 = ssub.s32 %s12, %s19
    %p89 = scmp.eq.s32.totalorder %s88, 0
    %s91 = sadd.s32 %s90, 1
    %s92 = scalar_select %p89, %s90, %s91
    %p95 = pneg %p89
    %p96 = scmp.eq.s32.totalorder %s12, 1
    %p97 = por %p95, %p96
    %p98 = scmp.ne.s32.totalorder %s90, %s93
    %p99 = scmp.eq.s32.totalorder %s12, 0
    %p100 = por %p98, %p99
    %p101 = scmp.ne.s32.totalorder %s90, %s93
    %p102 = scmp.eq.s32.totalorder %s17, 1
    %p103 = por %p101, %p102
    %p104 = scmp.ne.s32.totalorder %s93, %s94
    %p105 = scmp.eq.s32.totalorder %s17, 0
    %p106 = por %p104, %p105
    %p107 = scmp.ne.s32.totalorder %s93, %s94
    %p108 = scmp.eq.s32.totalorder %s18, 1
    %p109 = por %p107, %p108
    %p111 = scmp.ne.s32.totalorder %s94, %s110
    %p112 = scmp.eq.s32.totalorder %s18, 0
    %p113 = por %p111, %p112
    %s114 = ssub.s32 %s12, %s19
    %p115 = scmp.eq.s32.totalorder %s114, 0
    %s117 = sadd.s32 %s116, 1
    %s118 = scalar_select %p115, %s116, %s117
    %p121 = pneg %p115
    %p122 = scmp.eq.s32.totalorder %s12, 1
    %p123 = por %p121, %p122
    %p124 = scmp.ne.s32.totalorder %s116, %s119
    %p125 = scmp.eq.s32.totalorder %s12, 0
    %p126 = por %p124, %p125
    %p127 = scmp.ne.s32.totalorder %s116, %s119
    %p128 = scmp.eq.s32.totalorder %s17, 1
    %p129 = por %p127, %p128
    %p130 = scmp.ne.s32.totalorder %s119, %s120
    %p131 = scmp.eq.s32.totalorder %s17, 0
    %p132 = por %p130, %p131
    %p133 = scmp.ne.s32.totalorder %s119, %s120
    %p134 = scmp.eq.s32.totalorder %s18, 1
    %p135 = por %p133, %p134
    %p137 = scmp.ne.s32.totalorder %s120, %s136
    %p138 = scmp.eq.s32.totalorder %s18, 0
    %p139 = por %p137, %p138
    %s140 = ssub.s32 %s12, %s19
    %p141 = scmp.eq.s32.totalorder %s140, 0
    %s143 = sadd.s32 %s142, 1
    %s144 = scalar_select %p141, %s142, %s143
    %p147 = pneg %p141
    %p148 = scmp.eq.s32.totalorder %s12, 1
    %p149 = por %p147, %p148
    %p150 = scmp.ne.s32.totalorder %s142, %s145
    %p151 = scmp.eq.s32.totalorder %s12, 0
    %p152 = por %p150, %p151
    %p153 = scmp.ne.s32.totalorder %s142, %s145
    %p154 = scmp.eq.s32.totalorder %s17, 1
    %p155 = por %p153, %p154
    %p156 = scmp.ne.s32.totalorder %s145, %s146
    %p157 = scmp.eq.s32.totalorder %s17, 0
    %p158 = por %p156, %p157
    %p159 = scmp.ne.s32.totalorder %s145, %s146
    %p160 = scmp.eq.s32.totalorder %s18, 1
    %p161 = por %p159, %p160
    %p163 = scmp.ne.s32.totalorder %s146, %s162
    %p164 = scmp.eq.s32.totalorder %s18, 0
    %p165 = por %p163, %p164
    %p166 = scmp.le.s32.totalorder 1, %s12
    %p167 = scmp.lt.s32.totalorder %s12, 3
    %p168 = pnand %p166, %p167
    %p169 = pneg %p168
    // Predicated region
    $region9: #{convdis_forward.7} parent=5 // pred_check
      _
    $region10: #{convdis_forward.7} parent=5 // pred_check_branch
      %171 = sbr.rel (%p168) target = $region12
    $region11: #{convdis_forward.7} parent=5 // pred_region
      %s172 = ssub.s32 %s12, 1
      // Predicated region
      $region13: #{convdis_forward.7} parent=11 // pred_check
        %p173 = pneg %p59
      $region14: #{convdis_forward.7} parent=11 // pred_check_branch
        %175 = sbr.rel (%p173) target = $region16
      $region15: #{convdis_forward.7} parent=11 // pred_region
        _
      $region16: #{convdis_forward.7} parent=11 // pred_fallthru
        _
      // Predicated region
      $region17: #{convdis_forward.7} parent=11 // pred_check
        %p176 = pneg %p80
      $region18: #{convdis_forward.7} parent=11 // pred_check_branch
        %178 = sbr.rel (%p176) target = $region20
      $region19: #{convdis_forward.7} parent=11 // pred_region
        _
      $region20: #{convdis_forward.7} parent=11 // pred_fallthru
        _
    $region12: #{convdis_forward.7} parent=5 // pred_fallthru
      _
    %p179 = scmp.lt.s32.totalorder %s12, 2
    // Predicated region
    $region21: #{convdis_forward.7} parent=5 // pred_check
      %p180 = pneg %p179
    $region22: #{convdis_forward.7} parent=5 // pred_check_branch
      %182 = sbr.rel (%p180) target = $region24
    $region23: #{convdis_forward.7} parent=5 // pred_region
      // Predicated region
      $region25: #{convdis_forward.7} parent=23 // pred_check
        %p183 = pneg %p32
      $region26: #{convdis_forward.7} parent=23 // pred_check_branch
        %185 = sbr.rel (%p183) target = $region28
      $region27: #{convdis_forward.7} parent=23 // pred_region
        %s186 = smul.u32 2, %s12
        %p187 = scmp.lt.s32.totalorder %s186, 3
        %s188 = scalar_select %p187, %s186, 3
        %s189 = smul.addr %s188, 3
        %s190 = smul.addr %s189, 4
        %s191 = scalar_lea.vmem %s0, %s190
        %s192 = smul.u32 2, %s12
      $region28: #{convdis_forward.7} parent=23 // pred_fallthru
        _
    $region24: #{convdis_forward.7} parent=5 // pred_fallthru
      _
    %p193 = scmp.le.s32.totalorder 1, %s12
    %p194 = scmp.lt.s32.totalorder %s12, 3
    %p195 = pnand %p193, %p194
    %p196 = pneg %p195
    // Predicated region
    $region29: #{convdis_forward.7} parent=5 // pred_check
      _
    $region30: #{convdis_forward.7} parent=5 // pred_check_branch
      %198 = sbr.rel (%p195) target = $region32
    $region31: #{convdis_forward.7} parent=5 // pred_region
      %s199 = ssub.s32 %s12, 1
      %s200 = smul.u32 2, %s17
      %p201 = scmp.lt.s32.totalorder %s200, 3
      %s202 = scalar_select %p201, %s200, 3
      %s203 = smul.addr %s202, 3
      %s204 = smul.addr %s203, 4
      %s205 = scalar_lea.vmem %s0, %s204
      %p206 = pneg %p38
      %p207 = pneg %p35
      %p208 = pneg %p59
      %p209 = pneg %p56
      %p210 = pneg %p80
      %p211 = pneg %p77
      %p212 = pneg %p106
      %p213 = pneg %p103
      %s214 = smul.u32 2, %s17
      %p215 = scmp.lt.s32.totalorder %s214, 3
      %s216 = scalar_select %p215, %s214, 3
      %s217 = smul.addr %s216, 4
      %s218 = scalar_lea.vmem %s3, %s217
      %p219 = pneg %p132
      %p220 = pneg %p129
      %p221 = scmp.lt.s32.totalorder %s17, 1
      %s222 = scalar_select %p221, %s17, 1
      %s223 = scalar_lea.vmem %s4, %s222
      %p224 = pneg %p158
      %p225 = pneg %p155
      %p226 = scmp.lt.s32.totalorder %s17, 1
      %s227 = scalar_select %p226, %s17, 1
      %s228 = scalar_lea.vmem %s5, %s227
      %s229 = smul.u32 2, %s17
      %p230 = scmp.lt.s32.totalorder %s229, 3
      %s231 = scalar_select %p230, %s229, 3
      %s232 = smul.addr %s231, 3
      %s233 = smul.addr %s232, 4
      %s234 = scalar_lea.vmem %s0, %s233
      %s235 = smul.u32 2, %s17
      %s236 = smul.u32 2, %s17
      %p237 = scmp.lt.s32.totalorder %s236, 3
      %s238 = scalar_select %p237, %s236, 3
      %s239 = smul.addr %s238, 4
      %s240 = scalar_lea.vmem %s3, %s239
      %s241 = smul.u32 2, %s17
      %p242 = scmp.lt.s32.totalorder %s17, 1
      %s243 = scalar_select %p242, %s17, 1
      %s244 = scalar_lea.vmem %s4, %s243
      %p245 = scmp.lt.s32.totalorder %s17, 1
      %s246 = scalar_select %p245, %s17, 1
      %s247 = scalar_lea.vmem %s5, %s246
      %v249 = vld [vmem:[%s234] sm:$0xff]
      %v250 = vld [vmem:[%s234 + $0x8] sm:$0xf]
      %v251 = vld [vmem:[%s234 + $0xc] sm:$0xff]
      %v252 = vld [vmem:[%s234 + $0x14] sm:$0xf]
      %v253 = vld [vmem:[%s1] sm:$0xf]
      %v254 = vld [vmem:[%s1 + $0x4] sm:$0xf]
      %v255 = vld [vmem:[%s1 + $0x8] sm:$0xf]
      %v256 = vld [vmem:[%s1 + $0xc] sm:$0xf]
      %v257 = vld [vmem:[%s1 + $0x10] sm:$0xf]
      %v258 = vld [vmem:[%s1 + $0x14] sm:$0xf]
      %v259 = vld [vmem:[%s1 + $0x18] sm:$0xf]
      %v260 = vld [vmem:[%s1 + $0x1c] sm:$0xf]
      %v261 = vld [vmem:[%s1 + $0x20] sm:$0xf]
      %v262 = vld [vmem:[%s1 + $0x24] sm:$0xf]
      %v263 = vld [vmem:[%s1 + $0x28] sm:$0xf]
      %v264 = vld [vmem:[%s1 + $0x2c] sm:$0xf]
      %v265 = vld [vmem:[%s1 + $0x30] sm:$0xf]
      %v266 = vld [vmem:[%s1 + $0x34] sm:$0xf]
      %v267 = vld [vmem:[%s1 + $0x38] sm:$0xf]
      %v268 = vld [vmem:[%s1 + $0x3c] sm:$0xf]
      %v269 = vld [vmem:[%s1 + $0x40] sm:$0xf]
      %v270 = vld [vmem:[%s1 + $0x44] sm:$0xf]
      %v271 = vld [vmem:[%s1 + $0x48] sm:$0xf]
      %v272 = vld [vmem:[%s1 + $0x4c] sm:$0xf]
      %v273 = vld [vmem:[%s1 + $0x50] sm:$0xf]
      %v274 = vld [vmem:[%s1 + $0x54] sm:$0xf]
      %v275 = vld [vmem:[%s1 + $0x58] sm:$0xf]
      %v276 = vld [vmem:[%s1 + $0x5c] sm:$0xf]
      %v277 = vld [vmem:[%s1 + $0x60] sm:$0xf]
      %v278 = vld [vmem:[%s1 + $0x64] sm:$0xf]
      %v279 = vld [vmem:[%s1 + $0x68] sm:$0xf]
      %v280 = vld [vmem:[%s1 + $0x6c] sm:$0xf]
      %v281 = vld [vmem:[%s1 + $0x70] sm:$0xf]
      %v282 = vld [vmem:[%s1 + $0x74] sm:$0xf]
      %v283 = vld [vmem:[%s1 + $0x78] sm:$0xf]
      %v284 = vld [vmem:[%s1 + $0x7c] sm:$0xf]
      %v285 = vld [vmem:[%s1 + $0x80] sm:$0xf]
      %v286 = vld [vmem:[%s1 + $0x84] sm:$0xf]
      %v287 = vld [vmem:[%s1 + $0x88] sm:$0xf]
      %v288 = vld [vmem:[%s1 + $0x8c] sm:$0xf]
      %v289 = vld [vmem:[%s2] sm:$0x1]
      %v291 = vperm.slane %v289, 0
      %v297 = vunpack.c.l.b16 %v249
      %v298 = vunpack.c.h.b16 %v249
      %v299 = vunpack.c.l.b16 %v250
      %v300 = vunpack.c.l.b16 %v251
      %v301 = vunpack.c.h.b16 %v251
      %v302 = vunpack.c.l.b16 %v252
      %v303 = vpack.c.b16 %v300, %v297
      %v304 = vpack.c.b16 %v301, %v298
      %v305 = vpack.c.b16 %v302, %v299
      %v344 = vunpack.c.l.b16 %v253
      %v345 = vunpack.c.l.b16 %v254
      %v346 = vunpack.c.l.b16 %v255
      %v347 = vunpack.c.l.b16 %v256
      %v348 = vunpack.c.l.b16 %v257
      %v349 = vunpack.c.l.b16 %v258
      %v350 = vunpack.c.l.b16 %v259
      %v351 = vunpack.c.l.b16 %v260
      %v352 = vunpack.c.l.b16 %v261
      %v353 = vunpack.c.l.b16 %v262
      %v354 = vunpack.c.l.b16 %v263
      %v355 = vunpack.c.l.b16 %v264
      %v356 = vunpack.c.l.b16 %v265
      %v357 = vunpack.c.l.b16 %v266
      %v358 = vunpack.c.l.b16 %v267
      %v359 = vunpack.c.l.b16 %v268
      %v360 = vunpack.c.l.b16 %v269
      %v361 = vunpack.c.l.b16 %v270
      %v362 = vunpack.c.l.b16 %v271
      %v363 = vunpack.c.l.b16 %v272
      %v364 = vunpack.c.l.b16 %v273
      %v365 = vunpack.c.l.b16 %v274
      %v366 = vunpack.c.l.b16 %v275
      %v367 = vunpack.c.l.b16 %v276
      %v368 = vunpack.c.l.b16 %v277
      %v369 = vunpack.c.l.b16 %v278
      %v370 = vunpack.c.l.b16 %v279
      %v371 = vunpack.c.l.b16 %v280
      %v372 = vunpack.c.l.b16 %v281
      %v373 = vunpack.c.l.b16 %v282
      %v374 = vunpack.c.l.b16 %v283
      %v375 = vunpack.c.l.b16 %v284
      %v376 = vunpack.c.l.b16 %v285
      %v377 = vunpack.c.l.b16 %v286
      %v378 = vunpack.c.l.b16 %v287
      %v379 = vunpack.c.l.b16 %v288
      %v380 = vpack.c.b16 %v345, %v344
      %v381 = vpack.c.b16 %v347, %v346
      %v382 = vpack.c.b16 %v349, %v348
      %v383 = vpack.c.b16 %v351, %v350
      %v384 = vpack.c.b16 %v353, %v352
      %v385 = vpack.c.b16 %v355, %v354
      %v386 = vpack.c.b16 %v357, %v356
      %v387 = vpack.c.b16 %v359, %v358
      %v388 = vpack.c.b16 %v361, %v360
      %v389 = vpack.c.b16 %v363, %v362
      %v390 = vpack.c.b16 %v365, %v364
      %v391 = vpack.c.b16 %v367, %v366
      %v392 = vpack.c.b16 %v369, %v368
      %v393 = vpack.c.b16 %v371, %v370
      %v394 = vpack.c.b16 %v373, %v372
      %v395 = vpack.c.b16 %v375, %v374
      %v396 = vpack.c.b16 %v377, %v376
      %v397 = vpack.c.b16 %v379, %v378
      %vm416 = vcmask 261120
      %v418 = vsel %vm416, %v305, 0
      %420 = vmatpush.bf16.msra.mxu0 %v387
      %421 = vmatpush.bf16.msra.mxu0 %v386
      %422 = vmatpush.bf16.msra.mxu0 %v385
      %423 = vmatpush.bf16.msra.mxu0 %v384
      %424 = vmatpush.bf16.msra.mxu0 %v383
      %425 = vmatpush.bf16.msra.mxu0 %v382
      %426 = vmatpush.bf16.msra.mxu0 %v381
      %427 = vmatpush.bf16.msra.mxu0 %v380
      %428 = vmatmul.bf16.gmra.mxu0 %v303
      %v429 = vpop.f32.mrf.mxu0
      %v430 = vadd.f32 %v291, %v429
      %v431 = vpop.f32.mrf.mxu0
      %v432 = vadd.f32 %v291, %v431
      %433 = vdwg.mxu0
      %434 = vmatpush.bf16.msra.mxu0 %v395
      %435 = vmatpush.bf16.msra.mxu0 %v394
      %436 = vmatpush.bf16.msra.mxu0 %v393
      %437 = vmatpush.bf16.msra.mxu0 %v392
      %438 = vmatpush.bf16.msra.mxu0 %v391
      %439 = vmatpush.bf16.msra.mxu0 %v390
      %440 = vmatpush.bf16.msra.mxu0 %v389
      %441 = vmatpush.bf16.msra.mxu0 %v388
      %442 = vmatmul.bf16.gmra.mxu0 %v304
      %v443 = vpop.f32.mrf.mxu0
      %v444 = vadd.f32 %v430, %v443
      %v445 = vpop.f32.mrf.mxu0
      %v446 = vadd.f32 %v432, %v445
      %447 = vdwg.mxu0
      %448 = vmatpush.bf16.msra.mxu0 0
      %449 = vmatpush.bf16.msra.mxu0 0
      %450 = vmatpush.bf16.msra.mxu0 0
      %451 = vmatpush.bf16.msra.mxu0 0
      %452 = vmatpush.bf16.msra.mxu0 0
      %453 = vmatpush.bf16.msra.mxu0 0
      %454 = vmatpush.bf16.msra.mxu0 %v397
      %455 = vmatpush.bf16.msra.mxu0 %v396
      %456 = vmatmul.bf16.gmra.mxu0 %v418
      %v457 = vpop.f32.mrf.mxu0
      %v458 = vadd.f32 %v444, %v457
      %v459 = vpop.f32.mrf.mxu0
      %v460 = vadd.f32 %v446, %v459
      %461 = vdwg.mxu0
      %v462 = vmax.f32 %v458, 0.0
      %v463 = vmax.f32 %v460, 0.0
      %v464 = vpack.c.bf16 %v462, %v462
      %v465 = vpack.c.bf16 %v463, %v463
      %466 = vst [vmem:[%s240] sm:$0xf] %v464
      %467 = vst [vmem:[%s240 + $0x4] sm:$0xf] %v465
      %v468 = vadd.f32 %v462, %v463
      %v469 = vrot.slane %v468, 4
      %v470 = vadd.f32 %v468, %v469
      %v471 = vrot.slane %v470, 2
      %v472 = vadd.f32 %v470, %v471
      %v473 = vrot.slane %v472, 1
      %v474 = vadd.f32 %v472, %v473
      %475 = vst [vmem:[%s244] sm:$0x1] %v474
      %v476 = vmul.f32 %v462, %v462
      %v477 = vmul.f32 %v463, %v463
      %v478 = vadd.f32 %v476, %v477
      %v479 = vrot.slane %v478, 4
      %v480 = vadd.f32 %v478, %v479
      %v481 = vrot.slane %v480, 2
      %v482 = vadd.f32 %v480, %v481
      %v483 = vrot.slane %v482, 1
      %v484 = vadd.f32 %v482, %v483
      %485 = vst [vmem:[%s247] sm:$0x1] %v484
      %s486 = smul.u32 2, %s17
      %p487 = scmp.lt.s32.totalorder %s486, 3
      %s488 = scalar_select %p487, %s486, 3
      %s489 = smul.addr %s488, 4
      %s490 = scalar_lea.vmem %s3, %s489
      %p491 = scmp.lt.s32.totalorder %s17, 1
      %s492 = scalar_select %p491, %s17, 1
      %s493 = scalar_lea.vmem %s4, %s492
      %p494 = scmp.lt.s32.totalorder %s17, 1
      %s495 = scalar_select %p494, %s17, 1
      %s496 = scalar_lea.vmem %s5, %s495
      // Predicated region
      $region33: #{convdis_forward.7} parent=31 // pred_check
        %p497 = pneg %p103
      $region34: #{convdis_forward.7} parent=31 // pred_check_branch
        %499 = sbr.rel (%p497) target = $region36
      $region35: #{convdis_forward.7} parent=31 // pred_region
        %s500 = smul.u32 2, %s17
      $region36: #{convdis_forward.7} parent=31 // pred_fallthru
        _
      // Predicated region
      $region37: #{convdis_forward.7} parent=31 // pred_check
        %p501 = pneg %p129
      $region38: #{convdis_forward.7} parent=31 // pred_check_branch
        %503 = sbr.rel (%p501) target = $region40
      $region39: #{convdis_forward.7} parent=31 // pred_region
        _
      $region40: #{convdis_forward.7} parent=31 // pred_fallthru
        _
      // Predicated region
      $region41: #{convdis_forward.7} parent=31 // pred_check
        %p504 = pneg %p155
      $region42: #{convdis_forward.7} parent=31 // pred_check_branch
        %506 = sbr.rel (%p504) target = $region44
      $region43: #{convdis_forward.7} parent=31 // pred_region
        _
      $region44: #{convdis_forward.7} parent=31 // pred_fallthru
        _
    $region32: #{convdis_forward.7} parent=5 // pred_fallthru
      _
    %p507 = scmp.le.s32.totalorder 2, %s12
    // Predicated region
    $region45: #{convdis_forward.7} parent=5 // pred_check
      %p508 = pneg %p507
    $region46: #{convdis_forward.7} parent=5 // pred_check_branch
      %510 = sbr.rel (%p508) target = $region48
    $region47: #{convdis_forward.7} parent=5 // pred_region
      %s511 = ssub.s32 %s12, 2
      // Predicated region
      $region49: #{convdis_forward.7} parent=47 // pred_check
        %p512 = pneg %p109
      $region50: #{convdis_forward.7} parent=47 // pred_check_branch
        %514 = sbr.rel (%p512) target = $region52
      $region51: #{convdis_forward.7} parent=47 // pred_region
        %s515 = smul.u32 2, %s18
        %p516 = scmp.lt.s32.totalorder %s515, 3
        %s517 = scalar_select %p516, %s515, 3
        %s518 = smul.addr %s517, 4
        %s519 = scalar_lea.vmem %s3, %s518
      $region52: #{convdis_forward.7} parent=47 // pred_fallthru
        _
      // Predicated region
      $region53: #{convdis_forward.7} parent=47 // pred_check
        %p520 = pneg %p135
      $region54: #{convdis_forward.7} parent=47 // pred_check_branch
        %522 = sbr.rel (%p520) target = $region56
      $region55: #{convdis_forward.7} parent=47 // pred_region
        %p523 = scmp.lt.s32.totalorder %s18, 1
        %s524 = scalar_select %p523, %s18, 1
        %s525 = scalar_lea.vmem %s4, %s524
      $region56: #{convdis_forward.7} parent=47 // pred_fallthru
        _
      // Predicated region
      $region57: #{convdis_forward.7} parent=47 // pred_check
        %p526 = pneg %p161
      $region58: #{convdis_forward.7} parent=47 // pred_check_branch
        %528 = sbr.rel (%p526) target = $region60
      $region59: #{convdis_forward.7} parent=47 // pred_region
        %p529 = scmp.lt.s32.totalorder %s18, 1
        %s530 = scalar_select %p529, %s18, 1
        %s531 = scalar_lea.vmem %s5, %s530
      $region60: #{convdis_forward.7} parent=47 // pred_fallthru
        _
    $region48: #{convdis_forward.7} parent=5 // pred_fallthru
      _
  $region6: #{convdis_forward.7} parent=0 // loop_footer
    %s16 = sadd.s32 1, %s12
  $region7: #{convdis_forward.7} parent=0 // loop_footer_branch
    %11 = sbr.rel target = $region3
  $region8: #{convdis_forward.7} parent=0 // loop_exit
    _

// kernel: convdis_forward.10
$region0: #{convdis_forward.10}
  #allocation0 [shape = 'u32[]', space=smem, size = 0x4, offset = 0x4, fixed_abs, tag = 'smem constant byte address 0x4 - core index']
  #allocation1 [shape = 'u32[72,128]{1,0:T(1,128)}', space=vmem, size = 0x9000, scoped, tag = 'internal scratch']
  %s0 = inlined_call_operand.vmem [shape: bf16[16,288], index: 0, kind: input, shape index: {}]
  %s1 = inlined_call_operand.vmem [shape: bf16[288,128], index: 1, kind: input, shape index: {}]
  %s2 = inlined_call_operand.vmem [shape: f32[1,128], index: 2, kind: input, shape index: {}]
  %s3 = inlined_call_operand.vmem [shape: bf16[16,128], index: 3, kind: output, shape index: {}]
  %s4 = sld [smem:[#allocation0]]
  $region22: #{convdis_forward.10} parent=0
    _
  %s6 = ssub.s32 1, %s4
  %s7 = scalar_select 0, %s6, %s4
  // Predicated region
  $region2: #{convdis_forward.10} parent=0 // pred_check
    _
  $region3: #{convdis_forward.10} parent=0 // pred_check_branch
    %9 = sbr.rel (0) target = $region5
  $region4: #{convdis_forward.10} parent=0 // pred_region
    _
  $region5: #{convdis_forward.10} parent=0 // pred_fallthru
    _
  // Predicated region
  $region6: #{convdis_forward.10} parent=0 // pred_check
    _
  $region7: #{convdis_forward.10} parent=0 // pred_check_branch
    %11 = sbr.rel (0) target = $region9
  $region8: #{convdis_forward.10} parent=0 // pred_region
    _
  $region9: #{convdis_forward.10} parent=0 // pred_fallthru
    _
  // Predicated region
  $region10: #{convdis_forward.10} parent=0 // pred_check
    _
  $region11: #{convdis_forward.10} parent=0 // pred_check_branch
    %13 = sbr.rel (0) target = $region13
  $region12: #{convdis_forward.10} parent=0 // pred_region
    _
  $region13: #{convdis_forward.10} parent=0 // pred_fallthru
    _
  %v15 = vld [vmem:[%s0] sm:$0xff]
  %v16 = vld [vmem:[%s0 + $0x8] sm:$0xf]
  %v17 = vld [vmem:[%s0 + $0xc] sm:$0xff]
  %v18 = vld [vmem:[%s0 + $0x14] sm:$0xf]
  %v19 = vld [vmem:[%s1] sm:$0xf]
  %v20 = vld [vmem:[%s1 + $0x4] sm:$0xf]
  %v21 = vld [vmem:[%s1 + $0x8] sm:$0xf]
  %v22 = vld [vmem:[%s1 + $0xc] sm:$0xf]
  %v23 = vld [vmem:[%s1 + $0x10] sm:$0xf]
  %v24 = vld [vmem:[%s1 + $0x14] sm:$0xf]
  %v25 = vld [vmem:[%s1 + $0x18] sm:$0xf]
  %v26 = vld [vmem:[%s1 + $0x1c] sm:$0xf]
  %v27 = vld [vmem:[%s1 + $0x20] sm:$0xf]
  %v28 = vld [vmem:[%s1 + $0x24] sm:$0xf]
  %v29 = vld [vmem:[%s1 + $0x28] sm:$0xf]
  %v30 = vld [vmem:[%s1 + $0x2c] sm:$0xf]
  %v31 = vld [vmem:[%s1 + $0x30] sm:$0xf]
  %v32 = vld [vmem:[%s1 + $0x34] sm:$0xf]
  %v33 = vld [vmem:[%s1 + $0x38] sm:$0xf]
  %v34 = vld [vmem:[%s1 + $0x3c] sm:$0xf]
  %v35 = vld [vmem:[%s1 + $0x40] sm:$0xf]
  %v36 = vld [vmem:[%s1 + $0x44] sm:$0xf]
  %v37 = vld [vmem:[%s1 + $0x48] sm:$0xf]
  %v38 = vld [vmem:[%s1 + $0x4c] sm:$0xf]
  %v39 = vld [vmem:[%s1 + $0x50] sm:$0xf]
  %v40 = vld [vmem:[%s1 + $0x54] sm:$0xf]
  %v41 = vld [vmem:[%s1 + $0x58] sm:$0xf]
  %v42 = vld [vmem:[%s1 + $0x5c] sm:$0xf]
  %v43 = vld [vmem:[%s1 + $0x60] sm:$0xf]
  %v44 = vld [vmem:[%s1 + $0x64] sm:$0xf]
  %v45 = vld [vmem:[%s1 + $0x68] sm:$0xf]
  %v46 = vld [vmem:[%s1 + $0x6c] sm:$0xf]
  %v47 = vld [vmem:[%s1 + $0x70] sm:$0xf]
  %v48 = vld [vmem:[%s1 + $0x74] sm:$0xf]
  %v49 = vld [vmem:[%s1 + $0x78] sm:$0xf]
  %v50 = vld [vmem:[%s1 + $0x7c] sm:$0xf]
  %v51 = vld [vmem:[%s1 + $0x80] sm:$0xf]
  %v52 = vld [vmem:[%s1 + $0x84] sm:$0xf]
  %v53 = vld [vmem:[%s1 + $0x88] sm:$0xf]
  %v54 = vld [vmem:[%s1 + $0x8c] sm:$0xf]
  %v55 = vld [vmem:[%s2] sm:$0x1]
  %v57 = vperm.slane %v55, 0
  %v63 = vunpack.c.l.b16 %v15
  %v64 = vunpack.c.h.b16 %v15
  %v65 = vunpack.c.l.b16 %v16
  %v66 = vunpack.c.l.b16 %v17
  %v67 = vunpack.c.h.b16 %v17
  %v68 = vunpack.c.l.b16 %v18
  %v69 = vpack.c.b16 %v66, %v63
  %v70 = vpack.c.b16 %v67, %v64
  %v71 = vpack.c.b16 %v68, %v65
  %v110 = vunpack.c.l.b16 %v19
  %v111 = vunpack.c.l.b16 %v20
  %v112 = vunpack.c.l.b16 %v21
  %v113 = vunpack.c.l.b16 %v22
  %v114 = vunpack.c.l.b16 %v23
  %v115 = vunpack.c.l.b16 %v24
  %v116 = vunpack.c.l.b16 %v25
  %v117 = vunpack.c.l.b16 %v26
  %v118 = vunpack.c.l.b16 %v27
  %v119 = vunpack.c.l.b16 %v28
  %v120 = vunpack.c.l.b16 %v29
  %v121 = vunpack.c.l.b16 %v30
  %v122 = vunpack.c.l.b16 %v31
  %v123 = vunpack.c.l.b16 %v32
  %v124 = vunpack.c.l.b16 %v33
  %v125 = vunpack.c.l.b16 %v34
  %v126 = vunpack.c.l.b16 %v35
  %v127 = vunpack.c.l.b16 %v36
  %v128 = vunpack.c.l.b16 %v37
  %v129 = vunpack.c.l.b16 %v38
  %v130 = vunpack.c.l.b16 %v39
  %v131 = vunpack.c.l.b16 %v40
  %v132 = vunpack.c.l.b16 %v41
  %v133 = vunpack.c.l.b16 %v42
  %v134 = vunpack.c.l.b16 %v43
  %v135 = vunpack.c.l.b16 %v44
  %v136 = vunpack.c.l.b16 %v45
  %v137 = vunpack.c.l.b16 %v46
  %v138 = vunpack.c.l.b16 %v47
  %v139 = vunpack.c.l.b16 %v48
  %v140 = vunpack.c.l.b16 %v49
  %v141 = vunpack.c.l.b16 %v50
  %v142 = vunpack.c.l.b16 %v51
  %v143 = vunpack.c.l.b16 %v52
  %v144 = vunpack.c.l.b16 %v53
  %v145 = vunpack.c.l.b16 %v54
  %v146 = vpack.c.b16 %v111, %v110
  %v147 = vpack.c.b16 %v113, %v112
  %v148 = vpack.c.b16 %v115, %v114
  %v149 = vpack.c.b16 %v117, %v116
  %v150 = vpack.c.b16 %v119, %v118
  %v151 = vpack.c.b16 %v121, %v120
  %v152 = vpack.c.b16 %v123, %v122
  %v153 = vpack.c.b16 %v125, %v124
  %v154 = vpack.c.b16 %v127, %v126
  %v155 = vpack.c.b16 %v129, %v128
  %v156 = vpack.c.b16 %v131, %v130
  %v157 = vpack.c.b16 %v133, %v132
  %v158 = vpack.c.b16 %v135, %v134
  %v159 = vpack.c.b16 %v137, %v136
  %v160 = vpack.c.b16 %v139, %v138
  %v161 = vpack.c.b16 %v141, %v140
  %v162 = vpack.c.b16 %v143, %v142
  %v163 = vpack.c.b16 %v145, %v144
  %vm182 = vcmask 261120
  %v184 = vsel %vm182, %v71, 0
  %186 = vmatpush.bf16.msra.mxu0 %v153
  %187 = vmatpush.bf16.msra.mxu0 %v152
  %188 = vmatpush.bf16.msra.mxu0 %v151
  %189 = vmatpush.bf16.msra.mxu0 %v150
  %190 = vmatpush.bf16.msra.mxu0 %v149
  %191 = vmatpush.bf16.msra.mxu0 %v148
  %192 = vmatpush.bf16.msra.mxu0 %v147
  %193 = vmatpush.bf16.msra.mxu0 %v146
  %194 = vmatmul.bf16.gmra.mxu0 %v69
  %v195 = vpop.f32.mrf.mxu0
  %v196 = vadd.f32 %v57, %v195
  %v197 = vpop.f32.mrf.mxu0
  %v198 = vadd.f32 %v57, %v197
  %199 = vdwg.mxu0
  %200 = vmatpush.bf16.msra.mxu0 %v161
  %201 = vmatpush.bf16.msra.mxu0 %v160
  %202 = vmatpush.bf16.msra.mxu0 %v159
  %203 = vmatpush.bf16.msra.mxu0 %v158
  %204 = vmatpush.bf16.msra.mxu0 %v157
  %205 = vmatpush.bf16.msra.mxu0 %v156
  %206 = vmatpush.bf16.msra.mxu0 %v155
  %207 = vmatpush.bf16.msra.mxu0 %v154
  %208 = vmatmul.bf16.gmra.mxu0 %v70
  %v209 = vpop.f32.mrf.mxu0
  %v210 = vadd.f32 %v196, %v209
  %v211 = vpop.f32.mrf.mxu0
  %v212 = vadd.f32 %v198, %v211
  %213 = vdwg.mxu0
  %214 = vmatpush.bf16.msra.mxu0 0
  %215 = vmatpush.bf16.msra.mxu0 0
  %216 = vmatpush.bf16.msra.mxu0 0
  %217 = vmatpush.bf16.msra.mxu0 0
  %218 = vmatpush.bf16.msra.mxu0 0
  %219 = vmatpush.bf16.msra.mxu0 0
  %220 = vmatpush.bf16.msra.mxu0 %v163
  %221 = vmatpush.bf16.msra.mxu0 %v162
  %222 = vmatmul.bf16.gmra.mxu0 %v184
  %v223 = vpop.f32.mrf.mxu0
  %v224 = vadd.f32 %v210, %v223
  %v225 = vpop.f32.mrf.mxu0
  %v226 = vadd.f32 %v212, %v225
  %227 = vdwg.mxu0
  %v228 = vmax.f32 %v224, 0.0
  %v229 = vmax.f32 %v226, 0.0
  %v230 = vpack.c.bf16 %v228, %v228
  %v231 = vpack.c.bf16 %v229, %v229
  %232 = vst [vmem:[%s3] sm:$0xf] %v230
  %233 = vst [vmem:[%s3 + $0x4] sm:$0xf] %v231
  // Predicated region
  $region14: #{convdis_forward.10} parent=0 // pred_check
    _
  $region15: #{convdis_forward.10} parent=0 // pred_check_branch
    %235 = sbr.rel (0) target = $region17
  $region16: #{convdis_forward.10} parent=0 // pred_region
    _
  $region17: #{convdis_forward.10} parent=0 // pred_fallthru
    _
  // Predicated region
  $region18: #{convdis_forward.10} parent=0 // pred_check
    _
  $region19: #{convdis_forward.10} parent=0 // pred_check_branch
    %237 = sbr.rel (0) target = $region21
  $region20: #{convdis_forward.10} parent=0 // pred_region
    _
  $region21: #{convdis_forward.10} parent=0 // pred_fallthru
    _

// kernel: convdis_forward.11
$region0: #{convdis_forward.11}
  #allocation0 [shape = 'u32[]', space=smem, size = 0x4, offset = 0x4, fixed_abs, tag = 'smem constant byte address 0x4 - core index']
  #allocation1 [shape = 'u32[72,128]{1,0:T(1,128)}', space=vmem, size = 0x9000, scoped, tag = 'internal scratch']
  %s0 = inlined_call_operand.vmem [shape: bf16[16,288], index: 0, kind: input, shape index: {}]
  %s1 = inlined_call_operand.vmem [shape: bf16[288,128], index: 1, kind: input, shape index: {}]
  %s2 = inlined_call_operand.vmem [shape: f32[1,128], index: 2, kind: input, shape index: {}]
  %s3 = inlined_call_operand.vmem [shape: f32[16,128], index: 3, kind: output, shape index: {}]
  %s4 = sld [smem:[#allocation0]]
  $region22: #{convdis_forward.11} parent=0
    _
  %s6 = ssub.s32 1, %s4
  %s7 = scalar_select 0, %s6, %s4
  // Predicated region
  $region2: #{convdis_forward.11} parent=0 // pred_check
    _
  $region3: #{convdis_forward.11} parent=0 // pred_check_branch
    %9 = sbr.rel (0) target = $region5
  $region4: #{convdis_forward.11} parent=0 // pred_region
    _
  $region5: #{convdis_forward.11} parent=0 // pred_fallthru
    _
  // Predicated region
  $region6: #{convdis_forward.11} parent=0 // pred_check
    _
  $region7: #{convdis_forward.11} parent=0 // pred_check_branch
    %11 = sbr.rel (0) target = $region9
  $region8: #{convdis_forward.11} parent=0 // pred_region
    _
  $region9: #{convdis_forward.11} parent=0 // pred_fallthru
    _
  // Predicated region
  $region10: #{convdis_forward.11} parent=0 // pred_check
    _
  $region11: #{convdis_forward.11} parent=0 // pred_check_branch
    %13 = sbr.rel (0) target = $region13
  $region12: #{convdis_forward.11} parent=0 // pred_region
    _
  $region13: #{convdis_forward.11} parent=0 // pred_fallthru
    _
  %v15 = vld [vmem:[%s0] sm:$0xff]
  %v16 = vld [vmem:[%s0 + $0x8] sm:$0xf]
  %v17 = vld [vmem:[%s0 + $0xc] sm:$0xff]
  %v18 = vld [vmem:[%s0 + $0x14] sm:$0xf]
  %v19 = vld [vmem:[%s1] sm:$0xf]
  %v20 = vld [vmem:[%s1 + $0x4] sm:$0xf]
  %v21 = vld [vmem:[%s1 + $0x8] sm:$0xf]
  %v22 = vld [vmem:[%s1 + $0xc] sm:$0xf]
  %v23 = vld [vmem:[%s1 + $0x10] sm:$0xf]
  %v24 = vld [vmem:[%s1 + $0x14] sm:$0xf]
  %v25 = vld [vmem:[%s1 + $0x18] sm:$0xf]
  %v26 = vld [vmem:[%s1 + $0x1c] sm:$0xf]
  %v27 = vld [vmem:[%s1 + $0x20] sm:$0xf]
  %v28 = vld [vmem:[%s1 + $0x24] sm:$0xf]
  %v29 = vld [vmem:[%s1 + $0x28] sm:$0xf]
  %v30 = vld [vmem:[%s1 + $0x2c] sm:$0xf]
  %v31 = vld [vmem:[%s1 + $0x30] sm:$0xf]
  %v32 = vld [vmem:[%s1 + $0x34] sm:$0xf]
  %v33 = vld [vmem:[%s1 + $0x38] sm:$0xf]
  %v34 = vld [vmem:[%s1 + $0x3c] sm:$0xf]
  %v35 = vld [vmem:[%s1 + $0x40] sm:$0xf]
  %v36 = vld [vmem:[%s1 + $0x44] sm:$0xf]
  %v37 = vld [vmem:[%s1 + $0x48] sm:$0xf]
  %v38 = vld [vmem:[%s1 + $0x4c] sm:$0xf]
  %v39 = vld [vmem:[%s1 + $0x50] sm:$0xf]
  %v40 = vld [vmem:[%s1 + $0x54] sm:$0xf]
  %v41 = vld [vmem:[%s1 + $0x58] sm:$0xf]
  %v42 = vld [vmem:[%s1 + $0x5c] sm:$0xf]
  %v43 = vld [vmem:[%s1 + $0x60] sm:$0xf]
  %v44 = vld [vmem:[%s1 + $0x64] sm:$0xf]
  %v45 = vld [vmem:[%s1 + $0x68] sm:$0xf]
  %v46 = vld [vmem:[%s1 + $0x6c] sm:$0xf]
  %v47 = vld [vmem:[%s1 + $0x70] sm:$0xf]
  %v48 = vld [vmem:[%s1 + $0x74] sm:$0xf]
  %v49 = vld [vmem:[%s1 + $0x78] sm:$0xf]
  %v50 = vld [vmem:[%s1 + $0x7c] sm:$0xf]
  %v51 = vld [vmem:[%s1 + $0x80] sm:$0xf]
  %v52 = vld [vmem:[%s1 + $0x84] sm:$0xf]
  %v53 = vld [vmem:[%s1 + $0x88] sm:$0xf]
  %v54 = vld [vmem:[%s1 + $0x8c] sm:$0xf]
  %v55 = vld [vmem:[%s2] sm:$0x1]
  %v57 = vperm.slane %v55, 0
  %v63 = vunpack.c.l.b16 %v15
  %v64 = vunpack.c.h.b16 %v15
  %v65 = vunpack.c.l.b16 %v16
  %v66 = vunpack.c.l.b16 %v17
  %v67 = vunpack.c.h.b16 %v17
  %v68 = vunpack.c.l.b16 %v18
  %v69 = vpack.c.b16 %v66, %v63
  %v70 = vpack.c.b16 %v67, %v64
  %v71 = vpack.c.b16 %v68, %v65
  %v110 = vunpack.c.l.b16 %v19
  %v111 = vunpack.c.l.b16 %v20
  %v112 = vunpack.c.l.b16 %v21
  %v113 = vunpack.c.l.b16 %v22
  %v114 = vunpack.c.l.b16 %v23
  %v115 = vunpack.c.l.b16 %v24
  %v116 = vunpack.c.l.b16 %v25
  %v117 = vunpack.c.l.b16 %v26
  %v118 = vunpack.c.l.b16 %v27
  %v119 = vunpack.c.l.b16 %v28
  %v120 = vunpack.c.l.b16 %v29
  %v121 = vunpack.c.l.b16 %v30
  %v122 = vunpack.c.l.b16 %v31
  %v123 = vunpack.c.l.b16 %v32
  %v124 = vunpack.c.l.b16 %v33
  %v125 = vunpack.c.l.b16 %v34
  %v126 = vunpack.c.l.b16 %v35
  %v127 = vunpack.c.l.b16 %v36
  %v128 = vunpack.c.l.b16 %v37
  %v129 = vunpack.c.l.b16 %v38
  %v130 = vunpack.c.l.b16 %v39
  %v131 = vunpack.c.l.b16 %v40
  %v132 = vunpack.c.l.b16 %v41
  %v133 = vunpack.c.l.b16 %v42
  %v134 = vunpack.c.l.b16 %v43
  %v135 = vunpack.c.l.b16 %v44
  %v136 = vunpack.c.l.b16 %v45
  %v137 = vunpack.c.l.b16 %v46
  %v138 = vunpack.c.l.b16 %v47
  %v139 = vunpack.c.l.b16 %v48
  %v140 = vunpack.c.l.b16 %v49
  %v141 = vunpack.c.l.b16 %v50
  %v142 = vunpack.c.l.b16 %v51
  %v143 = vunpack.c.l.b16 %v52
  %v144 = vunpack.c.l.b16 %v53
  %v145 = vunpack.c.l.b16 %v54
  %v146 = vpack.c.b16 %v111, %v110
  %v147 = vpack.c.b16 %v113, %v112
  %v148 = vpack.c.b16 %v115, %v114
  %v149 = vpack.c.b16 %v117, %v116
  %v150 = vpack.c.b16 %v119, %v118
  %v151 = vpack.c.b16 %v121, %v120
  %v152 = vpack.c.b16 %v123, %v122
  %v153 = vpack.c.b16 %v125, %v124
  %v154 = vpack.c.b16 %v127, %v126
  %v155 = vpack.c.b16 %v129, %v128
  %v156 = vpack.c.b16 %v131, %v130
  %v157 = vpack.c.b16 %v133, %v132
  %v158 = vpack.c.b16 %v135, %v134
  %v159 = vpack.c.b16 %v137, %v136
  %v160 = vpack.c.b16 %v139, %v138
  %v161 = vpack.c.b16 %v141, %v140
  %v162 = vpack.c.b16 %v143, %v142
  %v163 = vpack.c.b16 %v145, %v144
  %vm182 = vcmask 261120
  %v184 = vsel %vm182, %v71, 0
  %186 = vmatpush.bf16.msra.mxu0 %v153
  %187 = vmatpush.bf16.msra.mxu0 %v152
  %188 = vmatpush.bf16.msra.mxu0 %v151
  %189 = vmatpush.bf16.msra.mxu0 %v150
  %190 = vmatpush.bf16.msra.mxu0 %v149
  %191 = vmatpush.bf16.msra.mxu0 %v148
  %192 = vmatpush.bf16.msra.mxu0 %v147
  %193 = vmatpush.bf16.msra.mxu0 %v146
  %194 = vmatmul.bf16.gmra.mxu0 %v69
  %v195 = vpop.f32.mrf.mxu0
  %v196 = vadd.f32 %v57, %v195
  %v197 = vpop.f32.mrf.mxu0
  %v198 = vadd.f32 %v57, %v197
  %199 = vdwg.mxu0
  %200 = vmatpush.bf16.msra.mxu0 %v161
  %201 = vmatpush.bf16.msra.mxu0 %v160
  %202 = vmatpush.bf16.msra.mxu0 %v159
  %203 = vmatpush.bf16.msra.mxu0 %v158
  %204 = vmatpush.bf16.msra.mxu0 %v157
  %205 = vmatpush.bf16.msra.mxu0 %v156
  %206 = vmatpush.bf16.msra.mxu0 %v155
  %207 = vmatpush.bf16.msra.mxu0 %v154
  %208 = vmatmul.bf16.gmra.mxu0 %v70
  %v209 = vpop.f32.mrf.mxu0
  %v210 = vadd.f32 %v196, %v209
  %v211 = vpop.f32.mrf.mxu0
  %v212 = vadd.f32 %v198, %v211
  %213 = vdwg.mxu0
  %214 = vmatpush.bf16.msra.mxu0 0
  %215 = vmatpush.bf16.msra.mxu0 0
  %216 = vmatpush.bf16.msra.mxu0 0
  %217 = vmatpush.bf16.msra.mxu0 0
  %218 = vmatpush.bf16.msra.mxu0 0
  %219 = vmatpush.bf16.msra.mxu0 0
  %220 = vmatpush.bf16.msra.mxu0 %v163
  %221 = vmatpush.bf16.msra.mxu0 %v162
  %222 = vmatmul.bf16.gmra.mxu0 %v184
  %v223 = vpop.f32.mrf.mxu0
  %v224 = vadd.f32 %v210, %v223
  %v225 = vpop.f32.mrf.mxu0
  %v226 = vadd.f32 %v212, %v225
  %227 = vdwg.mxu0
  %228 = vst [vmem:[%s3] sm:$0xff] %v224
  %229 = vst [vmem:[%s3 + $0x8] sm:$0xff] %v226
  // Predicated region
  $region14: #{convdis_forward.11} parent=0 // pred_check
    _
  $region15: #{convdis_forward.11} parent=0 // pred_check_branch
    %231 = sbr.rel (0) target = $region17
  $region16: #{convdis_forward.11} parent=0 // pred_region
    _
  $region17: #{convdis_forward.11} parent=0 // pred_fallthru
    _
  // Predicated region
  $region18: #{convdis_forward.11} parent=0 // pred_check
    _
  $region19: #{convdis_forward.11} parent=0 // pred_check_branch
    %233 = sbr.rel (0) target = $region21
  $region20: #{convdis_forward.11} parent=0 // pred_region
    _
  $region21: #{convdis_forward.11} parent=0 // pred_fallthru
    _

</llo_original>
